<compile_context>
chip_gen: v7x
topology: tpu7x:2x2x1
jax: 0.10.0
libtpu: 0.0.40
codegen_flags: <defaults>
</compile_context>

<pallas_src>
import numpy as np
import jax
import jax.numpy as jnp
from jax.experimental import pallas as pl
from jax.experimental.pallas import tpu as pltpu


# --------------------------------------------------------------------------- filters
def _filter_params(scale, steps=(1, 1, 1)):
    """Per-axis 1-D Gaussian taps + `size` (replicates LowPassFilter.__init__).

    Product of the three normalized 1-D taps equals the module's normalized 3-D kernel
    exactly (separability), so the per-axis passes reproduce F.conv3d with that kernel.
    """
    sigma = 0.5 * (scale ** 2 - 1) ** 0.5
    size = int(1 + 2 * 2.5 * sigma)
    if size % 2 == 0:
        size += 1
    r = np.linspace(-1.0, 1.0, size)
    taps = []
    for s in steps:
        a = r * s / min(steps)
        a = a[np.abs(a) <= 1]
        g = np.exp(-((size // 2) * a) ** 2 / (2.0 * sigma ** 2))
        taps.append(g / g.sum())
    return taps, size


def _gaussian_kernel_3d(scale, stride=1, transposed=False, steps=(1, 1, 1)):
    """Full 3-D kernel exactly as the PyTorch module builds it (reference only)."""
    sigma = 0.5 * (scale ** 2 - 1) ** 0.5
    size = int(1 + 2 * 2.5 * sigma)
    if size % 2 == 0:
        size += 1
    r = np.linspace(-1.0, 1.0, size)
    xs = r * steps[0] / min(steps); xs = xs[np.abs(xs) <= 1]
    ys = r * steps[1] / min(steps); ys = ys[np.abs(ys) <= 1]
    zs = r * steps[2] / min(steps); zs = zs[np.abs(zs) <= 1]
    lattice = np.stack(np.meshgrid(xs, ys, zs, indexing="ij"), axis=-1)
    lattice = (size // 2) * lattice
    kern = np.exp(-np.sum(lattice ** 2, axis=-1) / (2.0 * sigma ** 2))
    kern = kern / kern.sum()
    if transposed:
        kern = kern * stride ** 3
    return kern.astype(np.float32), size


def _toeplitz(w, n_in, pad):
    """Banded matrix T (n_in, n_out) s.t. (x @ T)[j] = sum_k w[k] * x_zeropad[j + k]."""
    K = w.shape[0]
    n_out = n_in + 2 * pad - K + 1
    T = np.zeros((n_in, n_out), np.float64)
    for i in range(n_in):
        for j in range(n_out):
            k = i - j + pad
            if 0 <= k < K:
                T[i, j] = w[k]
    return T


# --------------------------------------------------------------------------- kernel
def _lowpass_kernel(x_ref, tyz_ref, tx_ref, o_ref):
    """One grid step = TN flattened batch elements.

    x_ref  : (TN, X, Y*Z)     input block (lane-dense last dim)
    tyz_ref: (Y*Z, Yo*Zo)     fused Y/Z Toeplitz ("same" padding baked in)
    tx_ref : (TN*Xo, TN*X)    block-diagonal X Toeplitz = kron(I_TN, Tx^T)
    o_ref  : (TN, Xo, Yo*Zo)  output block (lane-dense last dim)
    """
    TN, X, YZ = x_ref.shape
    _, Xo, Mo = o_ref.shape
    x2d = x_ref[...].astype(jnp.float32).reshape(TN * X, YZ)
    # Y/Z separable pass: one MXU matmul (lane-axis conv, no lane shifts).
    h = jnp.dot(x2d, tyz_ref[...],
                precision=jax.lax.Precision.HIGHEST,
                preferred_element_type=jnp.float32)               # (TN*X, Mo)
    # X separable pass: second MXU matmul (block-diagonal over the batch block).
    out = jnp.dot(tx_ref[...], h,
                  precision=jax.lax.Precision.HIGHEST,
                  preferred_element_type=jnp.float32)             # (TN*Xo, Mo)
    o_ref[...] = out.reshape(TN, Xo, Mo).astype(o_ref.dtype)


# --------------------------------------------------------------------------- wrapper
def _choose_batch_block(N, per_elem_bytes, cap_bytes=4 << 20, max_tn=16):
    """Largest divisor of N that fits the VMEM budget, preferring >=2 grid steps."""
    divs = [d for d in range(1, min(N, max_tn) + 1) if N % d == 0]
    divs = [d for d in divs if d * per_elem_bytes <= cap_bytes] or [1]
    pref = [d for d in divs if N // d >= 2]   # keep both TensorCores busy (megacore)
    return max(pref) if pref else max(divs)


def low_pass_filter(image, scale, stride=1, transposed=False, steps=(1, 1, 1)):
    """Forward pass of LowPassFilter.  image: (..., x, y, z)."""
    if scale <= 1:
        assert stride == 1
        return image
    # TODO(synk): stride>1 and transposed (conv_transpose3d) paths not implemented.
    assert stride == 1 and not transposed

    taps, size = _filter_params(scale, steps)
    p = size // 2
    wx, wy, wz = taps

    X, Y, Z = image.shape[-3:]
    lead = image.shape[:-3]
    N = int(np.prod(lead)) if lead else 1

    Tx = _toeplitz(wx, X, p)                    # (X, Xo)
    Ty = _toeplitz(wy, Y, p)                    # (Y, Yo)
    Tz = _toeplitz(wz, Z, p)                    # (Z, Zo)
    Xo, Yo, Zo = Tx.shape[1], Ty.shape[1], Tz.shape[1]
    YZ, Mo = Y * Z, Yo * Zo

    per_elem_bytes = 4 * (X * YZ + Xo * Mo)     # in+out block bytes per batch element
    TN = _choose_batch_block(N, per_elem_bytes)
    grid = (N // TN,)

    tyz = jnp.asarray(np.kron(Ty, Tz), dtype=jnp.float32)            # (YZ, Mo)
    txb = jnp.asarray(np.kron(np.eye(TN), Tx.T), dtype=jnp.float32)  # (TN*Xo, TN*X)

    # Free reshape: lane-dense last dim (Y*Z), no host-side padding pass.
    x2 = image.reshape(N, X, YZ)

    out = pl.pallas_call(
        _lowpass_kernel,
        out_shape=jax.ShapeDtypeStruct((N, Xo, Mo), image.dtype),
        grid=grid,
        in_specs=[
            pl.BlockSpec((TN, X, YZ), lambda i: (i, 0, 0)),
            pl.BlockSpec((YZ, Mo), lambda i: (0, 0)),
            pl.BlockSpec((TN * Xo, TN * X), lambda i: (0, 0)),
        ],
        out_specs=pl.BlockSpec((TN, Xo, Mo), lambda i: (i, 0, 0)),
        compiler_params=pltpu.CompilerParams(
            dimension_semantics=("parallel",),
        ),
    )(x2, tyz, txb)

    return out.reshape(*lead, Xo, Yo, Zo)


# --------------------------------------------------------------------------- demo
if __name__ == "__main__":
    key = jax.random.PRNGKey(0)
    # (..., x, y, z) = (batch=2, channels=4, 16, 16, 16)
    image = jax.random.normal(key, (2, 4, 16, 16, 16), dtype=jnp.float32)
    scale = 2.0

    out = low_pass_filter(image, scale)
    out = jax.block_until_ready(out)
    assert out.shape == image.shape, (out.shape, image.shape)

    # Reference: direct 3-D conv with the module's kernel (mirrors F.conv3d).
    w3, size = _gaussian_kernel_3d(scale)
    p = size // 2
    x5 = image.reshape(-1, 1, *image.shape[-3:])
    ref = jax.lax.conv_general_dilated(
        x5,
        jnp.asarray(w3)[None, None],
        window_strides=(1, 1, 1),
        padding=[(p, p)] * 3,
        dimension_numbers=("NCDHW", "OIDHW", "NCDHW"),
        precision=jax.lax.Precision.HIGHEST,
    ).reshape(image.shape)

    np.testing.assert_allclose(np.asarray(out), np.asarray(ref), rtol=1e-5, atol=1e-5)
    print("KERNEL_OK")
</pallas_src>

<mosaic_0001>
module attributes {stable_mosaic.version = 11 : i64} {
  func.func @_lowpass_kernel(%arg0: i32, %arg1: memref<4x16x256xf32, #tpu.memory_space<vmem>>, %arg2: memref<256x256xf32, #tpu.memory_space<vmem>>, %arg3: memref<64x64xf32, #tpu.memory_space<vmem>>, %arg4: memref<4x16x256xf32, #tpu.memory_space<vmem>>) attributes {dimension_semantics = [#tpu.dimension_semantics<parallel>], iteration_bounds = array<i64: 2>, scalar_prefetch = 0 : i64, scratch_operands = 0 : i64, tpu.core_type = #tpu.core_type<tc>, window_params = [{transform_indices = @transform_0, window_bounds = array<i64: 4, 16, 256>}, {pipeline_mode = #tpu.pipeline_mode<synchronous>, transform_indices = @transform_1, window_bounds = array<i64: 256, 256>}, {pipeline_mode = #tpu.pipeline_mode<synchronous>, transform_indices = @transform_2, window_bounds = array<i64: 64, 64>}, {transform_indices = @transform_3, window_bounds = array<i64: 4, 16, 256>}]} {
    %c0 = arith.constant 0 : index
    %c0_0 = arith.constant 0 : index
    %c0_1 = arith.constant 0 : index
    %0 = vector.load %arg1[%c0, %c0_0, %c0_1] : memref<4x16x256xf32, #tpu.memory_space<vmem>>, vector<4x16x256xf32>
    %1 = vector.shape_cast %0 : vector<4x16x256xf32> to vector<64x256xf32>
    %c0_2 = arith.constant 0 : index
    %c0_3 = arith.constant 0 : index
    %2 = vector.load %arg2[%c0_2, %c0_3] : memref<256x256xf32, #tpu.memory_space<vmem>>, vector<256x256xf32>
    %cst = arith.constant dense<0.000000e+00> : vector<64x256xf32>
    %3 = tpu.matmul %1, %2, %cst {dimension_numbers = #tpu.dot_dimension_numbers<[1], [0], [0], [1], [0, 0, 1, 1], [], []>, precision = #tpu.contract_precision<fp32>} : vector<64x256xf32>, vector<256x256xf32>, vector<64x256xf32> -> vector<64x256xf32>
    %c0_4 = arith.constant 0 : index
    %c0_5 = arith.constant 0 : index
    %4 = vector.load %arg3[%c0_4, %c0_5] : memref<64x64xf32, #tpu.memory_space<vmem>>, vector<64x64xf32>
    %cst_6 = arith.constant dense<0.000000e+00> : vector<64x256xf32>
    %5 = tpu.matmul %4, %3, %cst_6 {dimension_numbers = #tpu.dot_dimension_numbers<[1], [0], [0], [1], [0, 0, 1, 1], [], []>, precision = #tpu.contract_precision<fp32>} : vector<64x64xf32>, vector<64x256xf32>, vector<64x256xf32> -> vector<64x256xf32>
    %6 = vector.shape_cast %5 : vector<64x256xf32> to vector<4x16x256xf32>
    %c0_7 = arith.constant 0 : index
    %c0_8 = arith.constant 0 : index
    %c0_9 = arith.constant 0 : index
    %7 = vector.load %arg4[%c0_7, %c0_8, %c0_9] : memref<4x16x256xf32, #tpu.memory_space<vmem>>, vector<4x16x256xf32>
    tpu.vector_store %arg4[%c0_7, %c0_8, %c0_9], %6 {strides = array<i32>} : memref<4x16x256xf32, #tpu.memory_space<vmem>>, vector<4x16x256xf32>,
    return
  }
  func.func @transform_0(%arg0: i32) -> (i32, i32, i32) {
    %c0_i32 = arith.constant 0 : i32
    %c0_i32_0 = arith.constant 0 : i32
    %c0_i32_1 = arith.constant 0 : i32
    return %arg0, %c0_i32, %c0_i32_0 : i32, i32, i32
  }
  func.func @transform_1(%arg0: i32) -> (i32, i32) {
    %c0_i32 = arith.constant 0 : i32
    %c0_i32_0 = arith.constant 0 : i32
    %c0_i32_1 = arith.constant 0 : i32
    return %c0_i32, %c0_i32_0 : i32, i32
  }
  func.func @transform_2(%arg0: i32) -> (i32, i32) {
    %c0_i32 = arith.constant 0 : i32
    %c0_i32_0 = arith.constant 0 : i32
    %c0_i32_1 = arith.constant 0 : i32
    return %c0_i32, %c0_i32_0 : i32, i32
  }
  func.func @transform_3(%arg0: i32) -> (i32, i32, i32) {
    %c0_i32 = arith.constant 0 : i32
    %c0_i32_0 = arith.constant 0 : i32
    %c0_i32_1 = arith.constant 0 : i32
    return %arg0, %c0_i32, %c0_i32_0 : i32, i32, i32
  }
}

</mosaic_0001>

<llo_original>
// kernel: tpu_custom_call.1
$region0: #{tpu_custom_call.1}
  #allocation0 [shape = 'u32[]', space=smem, size = 0x4, offset = 0x4, fixed_abs, tag = 'smem constant byte address 0x4 - core index']
  #allocation1 [shape = 'u32[144,128]{1,0:T(1,128)}', space=vmem, size = 0x12000, scoped, tag = 'internal scratch']
  %s0 = inlined_call_operand.hbm [shape: f32[8,16,256], index: 0, kind: input, shape index: {}]
  %s1 = inlined_call_operand.hbm [shape: f32[256,256], index: 1, kind: input, shape index: {}]
  %s2 = inlined_call_operand.hbm [shape: f32[64,64], index: 2, kind: input, shape index: {}]
  %s3 = inlined_call_operand.hbm [shape: f32[8,16,256], index: 3, kind: output, shape index: {}]
  %s4 = sld [smem:[#allocation0]]
  $region57: #{tpu_custom_call.1} parent=0
    _
  %s6 = ssub.s32 1, %s4
  %s7 = scalar_select 0, %s6, %s4
  $region1: #{tpu_custom_call.1} parent=0
    #allocation2 [shape = 'u8[131072]{0}', space=vmem, size = 0x20000, scoped, tag = 'input window, operand 0']
    #allocation3 [shape = 's32[2]{0}', space=sflag, size = 0x8, scoped, tag = 'scoped memory for tpu_custom_call.1']
    #allocation4 [shape = 's32[2]{0}', space=sflag, size = 0x8, scoped, tag = 'scoped memory for tpu_custom_call.1']
    #allocation5 [shape = 'u8[262144]{0}', space=vmem, size = 0x40000, scoped, tag = 'input window, operand 1, single buffered']
    #allocation6 [shape = 's32[1]{0}', space=sflag, size = 0x4, scoped, tag = 'scoped memory for tpu_custom_call.1']
    #allocation7 [shape = 'u8[32768]{0}', space=vmem, size = 0x8000, scoped, tag = 'input window, operand 2, single buffered']
    #allocation8 [shape = 'u8[131072]{0}', space=vmem, size = 0x20000, scoped, tag = 'output window, operand 0']
    %8 = vsyncpa [#allocation3], 0
    %s9 = scalar_lea.sflag [#allocation3], 1
    %10 = vsyncpa %s9, 0
    %11 = vsyncpa [#allocation6], 0
    %12 = vsyncpa [#allocation4], 0
    %s13 = scalar_lea.sflag [#allocation4], 1
    %14 = vsyncpa %s13, 0
    loop: start=0, step=1, limit=4
    $region2: #{tpu_custom_call.1} parent=1 // loop_pre_header
      _
    $region3: #{tpu_custom_call.1} parent=1 // loop_header
      %s16 = sphi 0, %s20
      %p17 = scmp.ge.s32.totalorder %s16, 4
      %s26 = sphi 0, %s28
      %s29 = sphi 0, %s26
      %s30 = sphi 0, %s29
      %s46 = sphi 0, %s30
      %s50 = sphi 0, %s50
      %s52 = sphi 0, %s50
      %s53 = sphi 0, %s52
      %s67 = sphi 0, %s53
      %s71 = sphi 0, %s71
      %s73 = sphi 0, %s71
      %s74 = sphi 0, %s73
      %s88 = sphi 0, %s74
      %s94 = sphi 0, %s96
      %s97 = sphi 0, %s94
      %s98 = sphi 0, %s97
      %s114 = sphi 0, %s98
    $region4: #{tpu_custom_call.1} parent=1 // loop_header_branch
      %19 = sbr.rel (%p17) target = $region8
    $region5: #{tpu_custom_call.1} parent=1 // loop_body
      %s21 = ssub.s32 %s16, 1
      %s22 = ssub.s32 %s16, 2
      %s23 = sadd.s32 %s16, 1
      %s24 = ssub.s32 %s16, %s23
      %p25 = scmp.eq.s32.totalorder %s24, 0
      %s27 = sadd.s32 %s26, 1
      %s28 = scalar_select %p25, %s26, %s27
      %p31 = pneg %p25
      %p32 = scmp.eq.s32.totalorder %s16, 1
      %p33 = por %p31, %p32
      %p34 = scmp.ne.s32.totalorder %s26, %s29
      %p35 = scmp.eq.s32.totalorder %s16, 0
      %p36 = por %p34, %p35
      %p37 = scmp.ne.s32.totalorder %s26, %s29
      %p38 = scmp.eq.s32.totalorder %s21, 1
      %p39 = por %p37, %p38
      %p40 = scmp.ne.s32.totalorder %s29, %s30
      %p41 = scmp.eq.s32.totalorder %s21, 0
      %p42 = por %p40, %p41
      %p43 = scmp.ne.s32.totalorder %s29, %s30
      %p44 = scmp.eq.s32.totalorder %s22, 1
      %p45 = por %p43, %p44
      %p47 = scmp.ne.s32.totalorder %s30, %s46
      %p48 = scmp.eq.s32.totalorder %s22, 0
      %p49 = por %p47, %p48
      %s51 = sadd.s32 %s50, 1
      %p54 = scmp.eq.s32.totalorder %s16, 1
      %p55 = scmp.ne.s32.totalorder %s50, %s52
      %p56 = scmp.eq.s32.totalorder %s16, 0
      %p57 = por %p55, %p56
      %p58 = scmp.ne.s32.totalorder %s50, %s52
      %p59 = scmp.eq.s32.totalorder %s21, 1
      %p60 = por %p58, %p59
      %p61 = scmp.ne.s32.totalorder %s52, %s53
      %p62 = scmp.eq.s32.totalorder %s21, 0
      %p63 = por %p61, %p62
      %p64 = scmp.ne.s32.totalorder %s52, %s53
      %p65 = scmp.eq.s32.totalorder %s22, 1
      %p66 = por %p64, %p65
      %p68 = scmp.ne.s32.totalorder %s53, %s67
      %p69 = scmp.eq.s32.totalorder %s22, 0
      %p70 = por %p68, %p69
      %s72 = sadd.s32 %s71, 1
      %p75 = scmp.eq.s32.totalorder %s16, 1
      %p76 = scmp.ne.s32.totalorder %s71, %s73
      %p77 = scmp.eq.s32.totalorder %s16, 0
      %p78 = por %p76, %p77
      %p79 = scmp.ne.s32.totalorder %s71, %s73
      %p80 = scmp.eq.s32.totalorder %s21, 1
      %p81 = por %p79, %p80
      %p82 = scmp.ne.s32.totalorder %s73, %s74
      %p83 = scmp.eq.s32.totalorder %s21, 0
      %p84 = por %p82, %p83
      %p85 = scmp.ne.s32.totalorder %s73, %s74
      %p86 = scmp.eq.s32.totalorder %s22, 1
      %p87 = por %p85, %p86
      %p89 = scmp.ne.s32.totalorder %s74, %s88
      %p90 = scmp.eq.s32.totalorder %s22, 0
      %p91 = por %p89, %p90
      %s92 = ssub.s32 %s16, %s23
      %p93 = scmp.eq.s32.totalorder %s92, 0
      %s95 = sadd.s32 %s94, 1
      %s96 = scalar_select %p93, %s94, %s95
      %p99 = pneg %p93
      %p100 = scmp.eq.s32.totalorder %s16, 1
      %p101 = por %p99, %p100
      %p102 = scmp.ne.s32.totalorder %s94, %s97
      %p103 = scmp.eq.s32.totalorder %s16, 0
      %p104 = por %p102, %p103
      %p105 = scmp.ne.s32.totalorder %s94, %s97
      %p106 = scmp.eq.s32.totalorder %s21, 1
      %p107 = por %p105, %p106
      %p108 = scmp.ne.s32.totalorder %s97, %s98
      %p109 = scmp.eq.s32.totalorder %s21, 0
      %p110 = por %p108, %p109
      %p111 = scmp.ne.s32.totalorder %s97, %s98
      %p112 = scmp.eq.s32.totalorder %s22, 1
      %p113 = por %p111, %p112
      %p115 = scmp.ne.s32.totalorder %s98, %s114
      %p116 = scmp.eq.s32.totalorder %s22, 0
      %p117 = por %p115, %p116
      %p118 = scmp.le.s32.totalorder 1, %s16
      %p119 = scmp.lt.s32.totalorder %s16, 3
      %p120 = pnand %p118, %p119
      %p121 = pneg %p120
      // Predicated region
      $region9: #{tpu_custom_call.1} parent=5 // pred_check
        _
      $region10: #{tpu_custom_call.1} parent=5 // pred_check_branch
        %123 = sbr.rel (%p120) target = $region12
      $region11: #{tpu_custom_call.1} parent=5 // pred_region
        %s124 = ssub.s32 %s16, 1
        // Predicated region
        $region13: #{tpu_custom_call.1} parent=11 // pred_check
          %p125 = pneg %p63
        $region14: #{tpu_custom_call.1} parent=11 // pred_check_branch
          %127 = sbr.rel (%p125) target = $region16
        $region15: #{tpu_custom_call.1} parent=11 // pred_region
          %s129 = ssub.s32 8192, 8192
          %130 = vsyncadd [#allocation6], %s129
          %s131 = sshll.u32 [#allocation5], 4
          %s132 = int_to_ptr.vmem [resolvable:$true] %s131
          %137 = dma.hbm_to_vmem [thread:$0]  %s1, 8192, %s132, [#allocation6], 256, 256, 16
        $region16: #{tpu_custom_call.1} parent=11 // pred_fallthru
          _
        // Predicated region
        $region17: #{tpu_custom_call.1} parent=11 // pred_check
          %p138 = pneg %p84
        $region18: #{tpu_custom_call.1} parent=11 // pred_check_branch
          %140 = sbr.rel (%p138) target = $region20
        $region19: #{tpu_custom_call.1} parent=11 // pred_region
          %s142 = ssub.s32 1024, 1024
          %143 = vsyncadd [#allocation6], %s142
          %s144 = sshll.u32 [#allocation7], 4
          %s145 = int_to_ptr.vmem [resolvable:$true] %s144
          %150 = dma.hbm_to_vmem [thread:$0]  %s2, 1024, %s145, [#allocation6], 128, 128, 8
        $region20: #{tpu_custom_call.1} parent=11 // pred_fallthru
          _
      $region12: #{tpu_custom_call.1} parent=5 // pred_fallthru
        _
      %p151 = scmp.lt.s32.totalorder %s16, 2
      // Predicated region
      $region21: #{tpu_custom_call.1} parent=5 // pred_check
        %p152 = pneg %p151
      $region22: #{tpu_custom_call.1} parent=5 // pred_check_branch
        %154 = sbr.rel (%p152) target = $region24
      $region23: #{tpu_custom_call.1} parent=5 // pred_region
        // Predicated region
        $region25: #{tpu_custom_call.1} parent=23 // pred_check
          %p155 = pneg %p36
        $region26: #{tpu_custom_call.1} parent=23 // pred_check_branch
          %157 = sbr.rel (%p155) target = $region28
        $region27: #{tpu_custom_call.1} parent=23 // pred_region
          %s158 = sand.u32 %s26, 1
          %s159 = scalar_lea.sflag [#allocation3], %s158
          %s160 = sand.u32 %s26, 1
          %s161 = smul.addr %s160, 128
          %s162 = scalar_lea.vmem [#allocation2], %s161
          %s163 = smul.u32 4, %s16
          %s165 = ssub.s32 2048, 2048
          %166 = vsyncadd %s159, %s165
          %s167 = smul.addr %s163, 4
          %s168 = smul.addr %s167, 128
          %s169 = scalar_lea.hbm %s0, %s168
          %s170 = sshll.u32 %s162, 4
          %s171 = int_to_ptr.vmem [resolvable:$true] %s170
          %176 = dma.hbm_to_vmem [thread:$0]  %s169, 2048, %s171, %s159, 256, 256, 16
        $region28: #{tpu_custom_call.1} parent=23 // pred_fallthru
          _
      $region24: #{tpu_custom_call.1} parent=5 // pred_fallthru
        _
      %p177 = scmp.le.s32.totalorder 1, %s16
      %p178 = scmp.lt.s32.totalorder %s16, 3
      %p179 = pnand %p177, %p178
      %p180 = pneg %p179
      // Predicated region
      $region29: #{tpu_custom_call.1} parent=5 // pred_check
        _
      $region30: #{tpu_custom_call.1} parent=5 // pred_check_branch
        %182 = sbr.rel (%p179) target = $region32
      $region31: #{tpu_custom_call.1} parent=5 // pred_region
        %s183 = ssub.s32 %s16, 1
        %s184 = sand.u32 %s29, 1
        %s185 = scalar_lea.sflag [#allocation3], %s184
        %s186 = sand.u32 %s29, 1
        %s187 = smul.addr %s186, 128
        %s188 = scalar_lea.vmem [#allocation2], %s187
        // Predicated region
        $region33: #{tpu_custom_call.1} parent=31 // pred_check
          %p189 = pneg %p42
        $region34: #{tpu_custom_call.1} parent=31 // pred_check_branch
          %191 = sbr.rel (%p189) target = $region36
        $region35: #{tpu_custom_call.1} parent=31 // pred_region
          %192 = dma.done %s185, 2048
        $region36: #{tpu_custom_call.1} parent=31 // pred_fallthru
          _
        // Predicated region
        $region37: #{tpu_custom_call.1} parent=31 // pred_check
          %p193 = pneg %p63
        $region38: #{tpu_custom_call.1} parent=31 // pred_check_branch
          %195 = sbr.rel (%p193) target = $region40
        $region39: #{tpu_custom_call.1} parent=31 // pred_region
          %196 = dma.done [#allocation6], 8192
        $region40: #{tpu_custom_call.1} parent=31 // pred_fallthru
          _
        // Predicated region
        $region41: #{tpu_custom_call.1} parent=31 // pred_check
          %p197 = pneg %p84
        $region42: #{tpu_custom_call.1} parent=31 // pred_check_branch
          %199 = sbr.rel (%p197) target = $region44
        $region43: #{tpu_custom_call.1} parent=31 // pred_region
          %200 = dma.done [#allocation6], 1024
        $region44: #{tpu_custom_call.1} parent=31 // pred_fallthru
          _
        %s201 = sand.u32 %s29, 1
        %s202 = scalar_lea.sflag [#allocation3], %s201
        %s203 = sand.u32 %s29, 1
        %s204 = smul.addr %s203, 128
        %s205 = scalar_lea.vmem [#allocation2], %s204
        %p206 = pneg %p42
        %p207 = pneg %p39
        %p208 = pneg %p63
        %p209 = pneg %p60
        %p210 = pneg %p84
        %p211 = pneg %p81
        %p212 = pneg %p110
        %p213 = pneg %p107
        %s214 = sand.u32 %s97, 1
        %s215 = scalar_lea.sflag [#allocation4], %s214
        %s216 = sand.u32 %s97, 1
        %s217 = smul.addr %s216, 128
        %s218 = scalar_lea.vmem [#allocation8], %s217
        %s219 = smul.u32 4, %s21
        %s220 = smul.u32 4, %s21
        %v221 = vld [vmem:[%s188] sm:$0xff]
        %v222 = vld [vmem:[%s188 + $0x8] sm:$0xff]
        %v223 = vld [vmem:[%s188 + $0x10] sm:$0xff]
        %v224 = vld [vmem:[%s188 + $0x18] sm:$0xff]
        %v225 = vld [vmem:[%s188 + $0x20] sm:$0xff]
        %v226 = vld [vmem:[%s188 + $0x28] sm:$0xff]
        %v227 = vld [vmem:[%s188 + $0x30] sm:$0xff]
        %v228 = vld [vmem:[%s188 + $0x38] sm:$0xff]
        %v229 = vld [vmem:[%s188 + $0x40] sm:$0xff]
        %v230 = vld [vmem:[%s188 + $0x48] sm:$0xff]
        %v231 = vld [vmem:[%s188 + $0x50] sm:$0xff]
        %v232 = vld [vmem:[%s188 + $0x58] sm:$0xff]
        %v233 = vld [vmem:[%s188 + $0x60] sm:$0xff]
        %v234 = vld [vmem:[%s188 + $0x68] sm:$0xff]
        %v235 = vld [vmem:[%s188 + $0x70] sm:$0xff]
        %v236 = vld [vmem:[%s188 + $0x78] sm:$0xff]
        %v237 = vld [vmem:[#allocation5] sm:$0xff]
        %v238 = vld [vmem:[#allocation5 + $0x8] sm:$0xff]
        %v239 = vld [vmem:[#allocation5 + $0x10] sm:$0xff]
        %v240 = vld [vmem:[#allocation5 + $0x18] sm:$0xff]
        %v241 = vld [vmem:[#allocation5 + $0x20] sm:$0xff]
        %v242 = vld [vmem:[#allocation5 + $0x28] sm:$0xff]
        %v243 = vld [vmem:[#allocation5 + $0x30] sm:$0xff]
        %v244 = vld [vmem:[#allocation5 + $0x38] sm:$0xff]
        %v245 = vld [vmem:[#allocation5 + $0x40] sm:$0xff]
        %v246 = vld [vmem:[#allocation5 + $0x48] sm:$0xff]
        %v247 = vld [vmem:[#allocation5 + $0x50] sm:$0xff]
        %v248 = vld [vmem:[#allocation5 + $0x58] sm:$0xff]
        %v249 = vld [vmem:[#allocation5 + $0x60] sm:$0xff]
        %v250 = vld [vmem:[#allocation5 + $0x68] sm:$0xff]
        %v251 = vld [vmem:[#allocation5 + $0x70] sm:$0xff]
        %v252 = vld [vmem:[#allocation5 + $0x78] sm:$0xff]
        %v253 = vld [vmem:[#allocation5 + $0x80] sm:$0xff]
        %v254 = vld [vmem:[#allocation5 + $0x88] sm:$0xff]
        %v255 = vld [vmem:[#allocation5 + $0x90] sm:$0xff]
        %v256 = vld [vmem:[#allocation5 + $0x98] sm:$0xff]
        %v257 = vld [vmem:[#allocation5 + $0xa0] sm:$0xff]
        %v258 = vld [vmem:[#allocation5 + $0xa8] sm:$0xff]
        %v259 = vld [vmem:[#allocation5 + $0xb0] sm:$0xff]
        %v260 = vld [vmem:[#allocation5 + $0xb8] sm:$0xff]
        %v261 = vld [vmem:[#allocation5 + $0xc0] sm:$0xff]
        %v262 = vld [vmem:[#allocation5 + $0xc8] sm:$0xff]
        %v263 = vld [vmem:[#allocation5 + $0xd0] sm:$0xff]
        %v264 = vld [vmem:[#allocation5 + $0xd8] sm:$0xff]
        %v265 = vld [vmem:[#allocation5 + $0xe0] sm:$0xff]
        %v266 = vld [vmem:[#allocation5 + $0xe8] sm:$0xff]
        %v267 = vld [vmem:[#allocation5 + $0xf0] sm:$0xff]
        %v268 = vld [vmem:[#allocation5 + $0xf8] sm:$0xff]
        %v269 = vld [vmem:[#allocation5 + $0x100] sm:$0xff]
        %v270 = vld [vmem:[#allocation5 + $0x108] sm:$0xff]
        %v271 = vld [vmem:[#allocation5 + $0x110] sm:$0xff]
        %v272 = vld [vmem:[#allocation5 + $0x118] sm:$0xff]
        %v273 = vld [vmem:[#allocation5 + $0x120] sm:$0xff]
        %v274 = vld [vmem:[#allocation5 + $0x128] sm:$0xff]
        %v275 = vld [vmem:[#allocation5 + $0x130] sm:$0xff]
        %v276 = vld [vmem:[#allocation5 + $0x138] sm:$0xff]
        %v277 = vld [vmem:[#allocation5 + $0x140] sm:$0xff]
        %v278 = vld [vmem:[#allocation5 + $0x148] sm:$0xff]
        %v279 = vld [vmem:[#allocation5 + $0x150] sm:$0xff]
        %v280 = vld [vmem:[#allocation5 + $0x158] sm:$0xff]
        %v281 = vld [vmem:[#allocation5 + $0x160] sm:$0xff]
        %v282 = vld [vmem:[#allocation5 + $0x168] sm:$0xff]
        %v283 = vld [vmem:[#allocation5 + $0x170] sm:$0xff]
        %v284 = vld [vmem:[#allocation5 + $0x178] sm:$0xff]
        %v285 = vld [vmem:[#allocation5 + $0x180] sm:$0xff]
        %v286 = vld [vmem:[#allocation5 + $0x188] sm:$0xff]
        %v287 = vld [vmem:[#allocation5 + $0x190] sm:$0xff]
        %v288 = vld [vmem:[#allocation5 + $0x198] sm:$0xff]
        %v289 = vld [vmem:[#allocation5 + $0x1a0] sm:$0xff]
        %v290 = vld [vmem:[#allocation5 + $0x1a8] sm:$0xff]
        %v291 = vld [vmem:[#allocation5 + $0x1b0] sm:$0xff]
        %v292 = vld [vmem:[#allocation5 + $0x1b8] sm:$0xff]
        %v293 = vld [vmem:[#allocation5 + $0x1c0] sm:$0xff]
        %v294 = vld [vmem:[#allocation5 + $0x1c8] sm:$0xff]
        %v295 = vld [vmem:[#allocation5 + $0x1d0] sm:$0xff]
        %v296 = vld [vmem:[#allocation5 + $0x1d8] sm:$0xff]
        %v297 = vld [vmem:[#allocation5 + $0x1e0] sm:$0xff]
        %v298 = vld [vmem:[#allocation5 + $0x1e8] sm:$0xff]
        %v299 = vld [vmem:[#allocation5 + $0x1f0] sm:$0xff]
        %v300 = vld [vmem:[#allocation5 + $0x1f8] sm:$0xff]
        %v301 = vand.u32 %v238, 4294901760
        %302 = vmatprep.subr.mxu0 %v301
        %v303 = vand.u32 %v237, 4294901760
        %304 = vmatpush1.msra.mxu0 %v303
        %v305 = vand.u32 %v240, 4294901760
        %306 = vmatprep.subr.mxu0 %v305
        %v307 = vand.u32 %v239, 4294901760
        %308 = vmatpush1.msra.mxu0 %v307
        %v309 = vand.u32 %v242, 4294901760
        %310 = vmatprep.subr.mxu0 %v309
        %v311 = vand.u32 %v241, 4294901760
        %312 = vmatpush1.msra.mxu0 %v311
        %v313 = vand.u32 %v244, 4294901760
        %314 = vmatprep.subr.mxu0 %v313
        %v315 = vand.u32 %v243, 4294901760
        %316 = vmatpush1.msra.mxu0 %v315
        %v317 = vand.u32 %v246, 4294901760
        %318 = vmatprep.subr.mxu0 %v317
        %v319 = vand.u32 %v245, 4294901760
        %320 = vmatpush1.msra.mxu0 %v319
        %v321 = vand.u32 %v248, 4294901760
        %322 = vmatprep.subr.mxu0 %v321
        %v323 = vand.u32 %v247, 4294901760
        %324 = vmatpush1.msra.mxu0 %v323
        %v325 = vand.u32 %v250, 4294901760
        %326 = vmatprep.subr.mxu0 %v325
        %v327 = vand.u32 %v249, 4294901760
        %328 = vmatpush1.msra.mxu0 %v327
        %v329 = vand.u32 %v252, 4294901760
        %330 = vmatprep.subr.mxu0 %v329
        %v331 = vand.u32 %v251, 4294901760
        %332 = vmatpush1.msra.mxu0 %v331
        %v333 = vand.u32 %v254, 4294901760
        %334 = vmatprep.subr.mxu0 %v333
        %v335 = vand.u32 %v253, 4294901760
        %336 = vmatpush1.msra.mxu0 %v335
        %v337 = vand.u32 %v256, 4294901760
        %338 = vmatprep.subr.mxu0 %v337
        %v339 = vand.u32 %v255, 4294901760
        %340 = vmatpush1.msra.mxu0 %v339
        %v341 = vand.u32 %v258, 4294901760
        %342 = vmatprep.subr.mxu0 %v341
        %v343 = vand.u32 %v257, 4294901760
        %344 = vmatpush1.msra.mxu0 %v343
        %v345 = vand.u32 %v260, 4294901760
        %346 = vmatprep.subr.mxu0 %v345
        %v347 = vand.u32 %v259, 4294901760
        %348 = vmatpush1.msra.mxu0 %v347
        %v349 = vand.u32 %v262, 4294901760
        %350 = vmatprep.subr.mxu0 %v349
        %v351 = vand.u32 %v261, 4294901760
        %352 = vmatpush1.msra.mxu0 %v351
        %v353 = vand.u32 %v264, 4294901760
        %354 = vmatprep.subr.mxu0 %v353
        %v355 = vand.u32 %v263, 4294901760
        %356 = vmatpush1.msra.mxu0 %v355
        %v357 = vand.u32 %v266, 4294901760
        %358 = vmatprep.subr.mxu0 %v357
        %v359 = vand.u32 %v265, 4294901760
        %360 = vmatpush1.msra.mxu0 %v359
        %v361 = vand.u32 %v268, 4294901760
        %362 = vmatprep.subr.mxu0 %v361
        %v363 = vand.u32 %v267, 4294901760
        %364 = vmatpush1.msra.mxu0 %v363
        %v365 = vand.u32 %v270, 4294901760
        %366 = vmatprep.subr.mxu0 %v365
        %v367 = vand.u32 %v269, 4294901760
        %368 = vmatpush1.msra.mxu0 %v367
        %v369 = vand.u32 %v272, 4294901760
        %370 = vmatprep.subr.mxu0 %v369
        %v371 = vand.u32 %v271, 4294901760
        %372 = vmatpush1.msra.mxu0 %v371
        %v373 = vand.u32 %v274, 4294901760
        %374 = vmatprep.subr.mxu0 %v373
        %v375 = vand.u32 %v273, 4294901760
        %376 = vmatpush1.msra.mxu0 %v375
        %v377 = vand.u32 %v276, 4294901760
        %378 = vmatprep.subr.mxu0 %v377
        %v379 = vand.u32 %v275, 4294901760
        %380 = vmatpush1.msra.mxu0 %v379
        %v381 = vand.u32 %v278, 4294901760
        %382 = vmatprep.subr.mxu0 %v381
        %v383 = vand.u32 %v277, 4294901760
        %384 = vmatpush1.msra.mxu0 %v383
        %v385 = vand.u32 %v280, 4294901760
        %386 = vmatprep.subr.mxu0 %v385
        %v387 = vand.u32 %v279, 4294901760
        %388 = vmatpush1.msra.mxu0 %v387
        %v389 = vand.u32 %v282, 4294901760
        %390 = vmatprep.subr.mxu0 %v389
        %v391 = vand.u32 %v281, 4294901760
        %392 = vmatpush1.msra.mxu0 %v391
        %v393 = vand.u32 %v284, 4294901760
        %394 = vmatprep.subr.mxu0 %v393
        %v395 = vand.u32 %v283, 4294901760
        %396 = vmatpush1.msra.mxu0 %v395
        %v397 = vand.u32 %v286, 4294901760
        %398 = vmatprep.subr.mxu0 %v397
        %v399 = vand.u32 %v285, 4294901760
        %400 = vmatpush1.msra.mxu0 %v399
        %v401 = vand.u32 %v288, 4294901760
        %402 = vmatprep.subr.mxu0 %v401
        %v403 = vand.u32 %v287, 4294901760
        %404 = vmatpush1.msra.mxu0 %v403
        %v405 = vand.u32 %v290, 4294901760
        %406 = vmatprep.subr.mxu0 %v405
        %v407 = vand.u32 %v289, 4294901760
        %408 = vmatpush1.msra.mxu0 %v407
        %v409 = vand.u32 %v292, 4294901760
        %410 = vmatprep.subr.mxu0 %v409
        %v411 = vand.u32 %v291, 4294901760
        %412 = vmatpush1.msra.mxu0 %v411
        %v413 = vand.u32 %v294, 4294901760
        %414 = vmatprep.subr.mxu0 %v413
        %v415 = vand.u32 %v293, 4294901760
        %416 = vmatpush1.msra.mxu0 %v415
        %v417 = vand.u32 %v296, 4294901760
        %418 = vmatprep.subr.mxu0 %v417
        %v419 = vand.u32 %v295, 4294901760
        %420 = vmatpush1.msra.mxu0 %v419
        %v421 = vand.u32 %v298, 4294901760
        %422 = vmatprep.subr.mxu0 %v421
        %v423 = vand.u32 %v297, 4294901760
        %424 = vmatpush1.msra.mxu0 %v423
        %v425 = vand.u32 %v300, 4294901760
        %426 = vmatprep.subr.mxu0 %v425
        %v427 = vand.u32 %v299, 4294901760
        %428 = vmatpush1.msra.mxu0 %v427
        %v429 = vand.u32 %v222, 4294901760
        %v430 = vsub.f32 %v222, %v429
        %v431 = vand.u32 %v430, 4294901760
        %v432 = vsub.f32 %v430, %v431
        %v433 = vand.u32 %v432, 4294901760
        %434 = vmatprep.mubr.f32.mxu0 %v433
        %v435 = vand.u32 %v221, 4294901760
        %v436 = vsub.f32 %v221, %v435
        %v437 = vand.u32 %v436, 4294901760
        %v438 = vsub.f32 %v436, %v437
        %v439 = vand.u32 %v438, 4294901760
        %440 = vmatmul.mubr.f32.gmra.mrb[0].mxu0 %v439
        %v441 = vpop.f32.mrb[0].mxu0
        %v442 = vadd.f32 0.0, %v441
        %v443 = vpop.f32.mrb[0].mxu0
        %v444 = vadd.f32 0.0, %v443
        %v445 = vand.u32 %v224, 4294901760
        %v446 = vsub.f32 %v224, %v445
        %v447 = vand.u32 %v446, 4294901760
        %v448 = vsub.f32 %v446, %v447
        %v449 = vand.u32 %v448, 4294901760
        %450 = vmatprep.mubr.f32.mxu0 %v449
        %v451 = vand.u32 %v223, 4294901760
        %v452 = vsub.f32 %v223, %v451
        %v453 = vand.u32 %v452, 4294901760
        %v454 = vsub.f32 %v452, %v453
        %v455 = vand.u32 %v454, 4294901760
        %456 = vmatmul.mubr.f32.gmra.mrb[0].mxu0 %v455
        %v457 = vpop.f32.mrb[0].mxu0
        %v458 = vadd.f32 0.0, %v457
        %v459 = vpop.f32.mrb[0].mxu0
        %v460 = vadd.f32 0.0, %v459
        %v461 = vand.u32 %v226, 4294901760
        %v462 = vsub.f32 %v226, %v461
        %v463 = vand.u32 %v462, 4294901760
        %v464 = vsub.f32 %v462, %v463
        %v465 = vand.u32 %v464, 4294901760
        %466 = vmatprep.mubr.f32.mxu0 %v465
        %v467 = vand.u32 %v225, 4294901760
        %v468 = vsub.f32 %v225, %v467
        %v469 = vand.u32 %v468, 4294901760
        %v470 = vsub.f32 %v468, %v469
        %v471 = vand.u32 %v470, 4294901760
        %472 = vmatmul.mubr.f32.gmra.mrb[0].mxu0 %v471
        %v473 = vpop.f32.mrb[0].mxu0
        %v474 = vadd.f32 0.0, %v473
        %v475 = vpop.f32.mrb[0].mxu0
        %v476 = vadd.f32 0.0, %v475
        %v477 = vand.u32 %v228, 4294901760
        %v478 = vsub.f32 %v228, %v477
        %v479 = vand.u32 %v478, 4294901760
        %v480 = vsub.f32 %v478, %v479
        %v481 = vand.u32 %v480, 4294901760
        %482 = vmatprep.mubr.f32.mxu0 %v481
        %v483 = vand.u32 %v227, 4294901760
        %v484 = vsub.f32 %v227, %v483
        %v485 = vand.u32 %v484, 4294901760
        %v486 = vsub.f32 %v484, %v485
        %v487 = vand.u32 %v486, 4294901760
        %488 = vmatmul.mubr.f32.gmra.mrb[0].mxu0 %v487
        %v489 = vpop.f32.mrb[0].mxu0
        %v490 = vadd.f32 0.0, %v489
        %v491 = vpop.f32.mrb[0].mxu0
        %v492 = vadd.f32 0.0, %v491
        %v493 = vand.u32 %v230, 4294901760
        %v494 = vsub.f32 %v230, %v493
        %v495 = vand.u32 %v494, 4294901760
        %v496 = vsub.f32 %v494, %v495
        %v497 = vand.u32 %v496, 4294901760
        %498 = vmatprep.mubr.f32.mxu0 %v497
        %v499 = vand.u32 %v229, 4294901760
        %v500 = vsub.f32 %v229, %v499
        %v501 = vand.u32 %v500, 4294901760
        %v502 = vsub.f32 %v500, %v501
        %v503 = vand.u32 %v502, 4294901760
        %504 = vmatmul.mubr.f32.gmra.mrb[0].mxu0 %v503
        %v505 = vpop.f32.mrb[0].mxu0
        %v506 = vadd.f32 0.0, %v505
        %v507 = vpop.f32.mrb[0].mxu0
        %v508 = vadd.f32 0.0, %v507
        %v509 = vand.u32 %v232, 4294901760
        %v510 = vsub.f32 %v232, %v509
        %v511 = vand.u32 %v510, 4294901760
        %v512 = vsub.f32 %v510, %v511
        %v513 = vand.u32 %v512, 4294901760
        %514 = vmatprep.mubr.f32.mxu0 %v513
        %v515 = vand.u32 %v231, 4294901760
        %v516 = vsub.f32 %v231, %v515
        %v517 = vand.u32 %v516, 4294901760
        %v518 = vsub.f32 %v516, %v517
        %v519 = vand.u32 %v518, 4294901760
        %520 = vmatmul.mubr.f32.gmra.mrb[0].mxu0 %v519
        %v521 = vpop.f32.mrb[0].mxu0
        %v522 = vadd.f32 0.0, %v521
        %v523 = vpop.f32.mrb[0].mxu0
        %v524 = vadd.f32 0.0, %v523
        %v525 = vand.u32 %v234, 4294901760
        %v526 = vsub.f32 %v234, %v525
        %v527 = vand.u32 %v526, 4294901760
        %v528 = vsub.f32 %v526, %v527
        %v529 = vand.u32 %v528, 4294901760
        %530 = vmatprep.mubr.f32.mxu0 %v529
        %v531 = vand.u32 %v233, 4294901760
        %v532 = vsub.f32 %v233, %v531
        %v533 = vand.u32 %v532, 4294901760
        %v534 = vsub.f32 %v532, %v533
        %v535 = vand.u32 %v534, 4294901760
        %536 = vmatmul.mubr.f32.gmra.mrb[0].mxu0 %v535
        %v537 = vpop.f32.mrb[0].mxu0
        %v538 = vadd.f32 0.0, %v537
        %v539 = vpop.f32.mrb[0].mxu0
        %v540 = vadd.f32 0.0, %v539
        %v541 = vand.u32 %v236, 4294901760
        %v542 = vsub.f32 %v236, %v541
        %v543 = vand.u32 %v542, 4294901760
        %v544 = vsub.f32 %v542, %v543
        %v545 = vand.u32 %v544, 4294901760
        %546 = vmatprep.mubr.f32.mxu0 %v545
        %v547 = vand.u32 %v235, 4294901760
        %v548 = vsub.f32 %v235, %v547
        %v549 = vand.u32 %v548, 4294901760
        %v550 = vsub.f32 %v548, %v549
        %v551 = vand.u32 %v550, 4294901760
        %552 = vmatmul.mubr.f32.gmra.mrb[0].mxu0 %v551
        %v553 = vpop.f32.mrb[0].mxu0
        %v554 = vadd.f32 0.0, %v553
        %v555 = vpop.f32.mrb[0].mxu0
        %v556 = vadd.f32 0.0, %v555
        %557 = vdwg.mxu0
        %v558 = vand.u32 %v238, 4294901760
        %v559 = vsub.f32 %v238, %v558
        %v560 = vand.u32 %v559, 4294901760
        %v561 = vsub.f32 %v559, %v560
        %v562 = vand.u32 %v561, 4294901760
        %563 = vmatprep.subr.mxu0 %v562
        %v564 = vand.u32 %v237, 4294901760
        %v565 = vsub.f32 %v237, %v564
        %v566 = vand.u32 %v565, 4294901760
        %v567 = vsub.f32 %v565, %v566
        %v568 = vand.u32 %v567, 4294901760
        %569 = vmatpush1.msra.mxu0 %v568
        %v570 = vand.u32 %v240, 4294901760
        %v571 = vsub.f32 %v240, %v570
        %v572 = vand.u32 %v571, 4294901760
        %v573 = vsub.f32 %v571, %v572
        %v574 = vand.u32 %v573, 4294901760
        %575 = vmatprep.subr.mxu0 %v574
        %v576 = vand.u32 %v239, 4294901760
        %v577 = vsub.f32 %v239, %v576
        %v578 = vand.u32 %v577, 4294901760
        %v579 = vsub.f32 %v577, %v578
        %v580 = vand.u32 %v579, 4294901760
        %581 = vmatpush1.msra.mxu0 %v580
        %v582 = vand.u32 %v242, 4294901760
        %v583 = vsub.f32 %v242, %v582
        %v584 = vand.u32 %v583, 4294901760
        %v585 = vsub.f32 %v583, %v584
        %v586 = vand.u32 %v585, 4294901760
        %587 = vmatprep.subr.mxu0 %v586
        %v588 = vand.u32 %v241, 4294901760
        %v589 = vsub.f32 %v241, %v588
        %v590 = vand.u32 %v589, 4294901760
        %v591 = vsub.f32 %v589, %v590
        %v592 = vand.u32 %v591, 4294901760
        %593 = vmatpush1.msra.mxu0 %v592
        %v594 = vand.u32 %v244, 4294901760
        %v595 = vsub.f32 %v244, %v594
        %v596 = vand.u32 %v595, 4294901760
        %v597 = vsub.f32 %v595, %v596
        %v598 = vand.u32 %v597, 4294901760
        %599 = vmatprep.subr.mxu0 %v598
        %v600 = vand.u32 %v243, 4294901760
        %v601 = vsub.f32 %v243, %v600
        %v602 = vand.u32 %v601, 4294901760
        %v603 = vsub.f32 %v601, %v602
        %v604 = vand.u32 %v603, 4294901760
        %605 = vmatpush1.msra.mxu0 %v604
        %v606 = vand.u32 %v246, 4294901760
        %v607 = vsub.f32 %v246, %v606
        %v608 = vand.u32 %v607, 4294901760
        %v609 = vsub.f32 %v607, %v608
        %v610 = vand.u32 %v609, 4294901760
        %611 = vmatprep.subr.mxu0 %v610
        %v612 = vand.u32 %v245, 4294901760
        %v613 = vsub.f32 %v245, %v612
        %v614 = vand.u32 %v613, 4294901760
        %v615 = vsub.f32 %v613, %v614
        %v616 = vand.u32 %v615, 4294901760
        %617 = vmatpush1.msra.mxu0 %v616
        %v618 = vand.u32 %v248, 4294901760
        %v619 = vsub.f32 %v248, %v618
        %v620 = vand.u32 %v619, 4294901760
        %v621 = vsub.f32 %v619, %v620
        %v622 = vand.u32 %v621, 4294901760
        %623 = vmatprep.subr.mxu0 %v622
        %v624 = vand.u32 %v247, 4294901760
        %v625 = vsub.f32 %v247, %v624
        %v626 = vand.u32 %v625, 4294901760
        %v627 = vsub.f32 %v625, %v626
        %v628 = vand.u32 %v627, 4294901760
        %629 = vmatpush1.msra.mxu0 %v628
        %v630 = vand.u32 %v250, 4294901760
        %v631 = vsub.f32 %v250, %v630
        %v632 = vand.u32 %v631, 4294901760
        %v633 = vsub.f32 %v631, %v632
        %v634 = vand.u32 %v633, 4294901760
        %635 = vmatprep.subr.mxu0 %v634
        %v636 = vand.u32 %v249, 4294901760
        %v637 = vsub.f32 %v249, %v636
        %v638 = vand.u32 %v637, 4294901760
        %v639 = vsub.f32 %v637, %v638
        %v640 = vand.u32 %v639, 4294901760
        %641 = vmatpush1.msra.mxu0 %v640
        %v642 = vand.u32 %v252, 4294901760
        %v643 = vsub.f32 %v252, %v642
        %v644 = vand.u32 %v643, 4294901760
        %v645 = vsub.f32 %v643, %v644
        %v646 = vand.u32 %v645, 4294901760
        %647 = vmatprep.subr.mxu0 %v646
        %v648 = vand.u32 %v251, 4294901760
        %v649 = vsub.f32 %v251, %v648
        %v650 = vand.u32 %v649, 4294901760
        %v651 = vsub.f32 %v649, %v650
        %v652 = vand.u32 %v651, 4294901760
        %653 = vmatpush1.msra.mxu0 %v652
        %v654 = vand.u32 %v254, 4294901760
        %v655 = vsub.f32 %v254, %v654
        %v656 = vand.u32 %v655, 4294901760
        %v657 = vsub.f32 %v655, %v656
        %v658 = vand.u32 %v657, 4294901760
        %659 = vmatprep.subr.mxu0 %v658
        %v660 = vand.u32 %v253, 4294901760
        %v661 = vsub.f32 %v253, %v660
        %v662 = vand.u32 %v661, 4294901760
        %v663 = vsub.f32 %v661, %v662
        %v664 = vand.u32 %v663, 4294901760
        %665 = vmatpush1.msra.mxu0 %v664
        %v666 = vand.u32 %v256, 4294901760
        %v667 = vsub.f32 %v256, %v666
        %v668 = vand.u32 %v667, 4294901760
        %v669 = vsub.f32 %v667, %v668
        %v670 = vand.u32 %v669, 4294901760
        %671 = vmatprep.subr.mxu0 %v670
        %v672 = vand.u32 %v255, 4294901760
        %v673 = vsub.f32 %v255, %v672
        %v674 = vand.u32 %v673, 4294901760
        %v675 = vsub.f32 %v673, %v674
        %v676 = vand.u32 %v675, 4294901760
        %677 = vmatpush1.msra.mxu0 %v676
        %v678 = vand.u32 %v258, 4294901760
        %v679 = vsub.f32 %v258, %v678
        %v680 = vand.u32 %v679, 4294901760
        %v681 = vsub.f32 %v679, %v680
        %v682 = vand.u32 %v681, 4294901760
        %683 = vmatprep.subr.mxu0 %v682
        %v684 = vand.u32 %v257, 4294901760
        %v685 = vsub.f32 %v257, %v684
        %v686 = vand.u32 %v685, 4294901760
        %v687 = vsub.f32 %v685, %v686
        %v688 = vand.u32 %v687, 4294901760
        %689 = vmatpush1.msra.mxu0 %v688
        %v690 = vand.u32 %v260, 4294901760
        %v691 = vsub.f32 %v260, %v690
        %v692 = vand.u32 %v691, 4294901760
        %v693 = vsub.f32 %v691, %v692
        %v694 = vand.u32 %v693, 4294901760
        %695 = vmatprep.subr.mxu0 %v694
        %v696 = vand.u32 %v259, 4294901760
        %v697 = vsub.f32 %v259, %v696
        %v698 = vand.u32 %v697, 4294901760
        %v699 = vsub.f32 %v697, %v698
        %v700 = vand.u32 %v699, 4294901760
        %701 = vmatpush1.msra.mxu0 %v700
        %v702 = vand.u32 %v262, 4294901760
        %v703 = vsub.f32 %v262, %v702
        %v704 = vand.u32 %v703, 4294901760
        %v705 = vsub.f32 %v703, %v704
        %v706 = vand.u32 %v705, 4294901760
        %707 = vmatprep.subr.mxu0 %v706
        %v708 = vand.u32 %v261, 4294901760
        %v709 = vsub.f32 %v261, %v708
        %v710 = vand.u32 %v709, 4294901760
        %v711 = vsub.f32 %v709, %v710
        %v712 = vand.u32 %v711, 4294901760
        %713 = vmatpush1.msra.mxu0 %v712
        %v714 = vand.u32 %v264, 4294901760
        %v715 = vsub.f32 %v264, %v714
        %v716 = vand.u32 %v715, 4294901760
        %v717 = vsub.f32 %v715, %v716
        %v718 = vand.u32 %v717, 4294901760
        %719 = vmatprep.subr.mxu0 %v718
        %v720 = vand.u32 %v263, 4294901760
        %v721 = vsub.f32 %v263, %v720
        %v722 = vand.u32 %v721, 4294901760
        %v723 = vsub.f32 %v721, %v722
        %v724 = vand.u32 %v723, 4294901760
        %725 = vmatpush1.msra.mxu0 %v724
        %v726 = vand.u32 %v266, 4294901760
        %v727 = vsub.f32 %v266, %v726
        %v728 = vand.u32 %v727, 4294901760
        %v729 = vsub.f32 %v727, %v728
        %v730 = vand.u32 %v729, 4294901760
        %731 = vmatprep.subr.mxu0 %v730
        %v732 = vand.u32 %v265, 4294901760
        %v733 = vsub.f32 %v265, %v732
        %v734 = vand.u32 %v733, 4294901760
        %v735 = vsub.f32 %v733, %v734
        %v736 = vand.u32 %v735, 4294901760
        %737 = vmatpush1.msra.mxu0 %v736
        %v738 = vand.u32 %v268, 4294901760
        %v739 = vsub.f32 %v268, %v738
        %v740 = vand.u32 %v739, 4294901760
        %v741 = vsub.f32 %v739, %v740
        %v742 = vand.u32 %v741, 4294901760
        %743 = vmatprep.subr.mxu0 %v742
        %v744 = vand.u32 %v267, 4294901760
        %v745 = vsub.f32 %v267, %v744
        %v746 = vand.u32 %v745, 4294901760
        %v747 = vsub.f32 %v745, %v746
        %v748 = vand.u32 %v747, 4294901760
        %749 = vmatpush1.msra.mxu0 %v748
        %v750 = vand.u32 %v270, 4294901760
        %v751 = vsub.f32 %v270, %v750
        %v752 = vand.u32 %v751, 4294901760
        %v753 = vsub.f32 %v751, %v752
        %v754 = vand.u32 %v753, 4294901760
        %755 = vmatprep.subr.mxu0 %v754
        %v756 = vand.u32 %v269, 4294901760
        %v757 = vsub.f32 %v269, %v756
        %v758 = vand.u32 %v757, 4294901760
        %v759 = vsub.f32 %v757, %v758
        %v760 = vand.u32 %v759, 4294901760
        %761 = vmatpush1.msra.mxu0 %v760
        %v762 = vand.u32 %v272, 4294901760
        %v763 = vsub.f32 %v272, %v762
        %v764 = vand.u32 %v763, 4294901760
        %v765 = vsub.f32 %v763, %v764
        %v766 = vand.u32 %v765, 4294901760
        %767 = vmatprep.subr.mxu0 %v766
        %v768 = vand.u32 %v271, 4294901760
        %v769 = vsub.f32 %v271, %v768
        %v770 = vand.u32 %v769, 4294901760
        %v771 = vsub.f32 %v769, %v770
        %v772 = vand.u32 %v771, 4294901760
        %773 = vmatpush1.msra.mxu0 %v772
        %v774 = vand.u32 %v274, 4294901760
        %v775 = vsub.f32 %v274, %v774
        %v776 = vand.u32 %v775, 4294901760
        %v777 = vsub.f32 %v775, %v776
        %v778 = vand.u32 %v777, 4294901760
        %779 = vmatprep.subr.mxu0 %v778
        %v780 = vand.u32 %v273, 4294901760
        %v781 = vsub.f32 %v273, %v780
        %v782 = vand.u32 %v781, 4294901760
        %v783 = vsub.f32 %v781, %v782
        %v784 = vand.u32 %v783, 4294901760
        %785 = vmatpush1.msra.mxu0 %v784
        %v786 = vand.u32 %v276, 4294901760
        %v787 = vsub.f32 %v276, %v786
        %v788 = vand.u32 %v787, 4294901760
        %v789 = vsub.f32 %v787, %v788
        %v790 = vand.u32 %v789, 4294901760
        %791 = vmatprep.subr.mxu0 %v790
        %v792 = vand.u32 %v275, 4294901760
        %v793 = vsub.f32 %v275, %v792
        %v794 = vand.u32 %v793, 4294901760
        %v795 = vsub.f32 %v793, %v794
        %v796 = vand.u32 %v795, 4294901760
        %797 = vmatpush1.msra.mxu0 %v796
        %v798 = vand.u32 %v278, 4294901760
        %v799 = vsub.f32 %v278, %v798
        %v800 = vand.u32 %v799, 4294901760
        %v801 = vsub.f32 %v799, %v800
        %v802 = vand.u32 %v801, 4294901760
        %803 = vmatprep.subr.mxu0 %v802
        %v804 = vand.u32 %v277, 4294901760
        %v805 = vsub.f32 %v277, %v804
        %v806 = vand.u32 %v805, 4294901760
        %v807 = vsub.f32 %v805, %v806
        %v808 = vand.u32 %v807, 4294901760
        %809 = vmatpush1.msra.mxu0 %v808
        %v810 = vand.u32 %v280, 4294901760
        %v811 = vsub.f32 %v280, %v810
        %v812 = vand.u32 %v811, 4294901760
        %v813 = vsub.f32 %v811, %v812
        %v814 = vand.u32 %v813, 4294901760
        %815 = vmatprep.subr.mxu0 %v814
        %v816 = vand.u32 %v279, 4294901760
        %v817 = vsub.f32 %v279, %v816
        %v818 = vand.u32 %v817, 4294901760
        %v819 = vsub.f32 %v817, %v818
        %v820 = vand.u32 %v819, 4294901760
        %821 = vmatpush1.msra.mxu0 %v820
        %v822 = vand.u32 %v282, 4294901760
        %v823 = vsub.f32 %v282, %v822
        %v824 = vand.u32 %v823, 4294901760
        %v825 = vsub.f32 %v823, %v824
        %v826 = vand.u32 %v825, 4294901760
        %827 = vmatprep.subr.mxu0 %v826
        %v828 = vand.u32 %v281, 4294901760
        %v829 = vsub.f32 %v281, %v828
        %v830 = vand.u32 %v829, 4294901760
        %v831 = vsub.f32 %v829, %v830
        %v832 = vand.u32 %v831, 4294901760
        %833 = vmatpush1.msra.mxu0 %v832
        %v834 = vand.u32 %v284, 4294901760
        %v835 = vsub.f32 %v284, %v834
        %v836 = vand.u32 %v835, 4294901760
        %v837 = vsub.f32 %v835, %v836
        %v838 = vand.u32 %v837, 4294901760
        %839 = vmatprep.subr.mxu0 %v838
        %v840 = vand.u32 %v283, 4294901760
        %v841 = vsub.f32 %v283, %v840
        %v842 = vand.u32 %v841, 4294901760
        %v843 = vsub.f32 %v841, %v842
        %v844 = vand.u32 %v843, 4294901760
        %845 = vmatpush1.msra.mxu0 %v844
        %v846 = vand.u32 %v286, 4294901760
        %v847 = vsub.f32 %v286, %v846
        %v848 = vand.u32 %v847, 4294901760
        %v849 = vsub.f32 %v847, %v848
        %v850 = vand.u32 %v849, 4294901760
        %851 = vmatprep.subr.mxu0 %v850
        %v852 = vand.u32 %v285, 4294901760
        %v853 = vsub.f32 %v285, %v852
        %v854 = vand.u32 %v853, 4294901760
        %v855 = vsub.f32 %v853, %v854
        %v856 = vand.u32 %v855, 4294901760
        %857 = vmatpush1.msra.mxu0 %v856
        %v858 = vand.u32 %v288, 4294901760
        %v859 = vsub.f32 %v288, %v858
        %v860 = vand.u32 %v859, 4294901760
        %v861 = vsub.f32 %v859, %v860
        %v862 = vand.u32 %v861, 4294901760
        %863 = vmatprep.subr.mxu0 %v862
        %v864 = vand.u32 %v287, 4294901760
        %v865 = vsub.f32 %v287, %v864
        %v866 = vand.u32 %v865, 4294901760
        %v867 = vsub.f32 %v865, %v866
        %v868 = vand.u32 %v867, 4294901760
        %869 = vmatpush1.msra.mxu0 %v868
        %v870 = vand.u32 %v290, 4294901760
        %v871 = vsub.f32 %v290, %v870
        %v872 = vand.u32 %v871, 4294901760
        %v873 = vsub.f32 %v871, %v872
        %v874 = vand.u32 %v873, 4294901760
        %875 = vmatprep.subr.mxu0 %v874
        %v876 = vand.u32 %v289, 4294901760
        %v877 = vsub.f32 %v289, %v876
        %v878 = vand.u32 %v877, 4294901760
        %v879 = vsub.f32 %v877, %v878
        %v880 = vand.u32 %v879, 4294901760
        %881 = vmatpush1.msra.mxu0 %v880
        %v882 = vand.u32 %v292, 4294901760
        %v883 = vsub.f32 %v292, %v882
        %v884 = vand.u32 %v883, 4294901760
        %v885 = vsub.f32 %v883, %v884
        %v886 = vand.u32 %v885, 4294901760
        %887 = vmatprep.subr.mxu0 %v886
        %v888 = vand.u32 %v291, 4294901760
        %v889 = vsub.f32 %v291, %v888
        %v890 = vand.u32 %v889, 4294901760
        %v891 = vsub.f32 %v889, %v890
        %v892 = vand.u32 %v891, 4294901760
        %893 = vmatpush1.msra.mxu0 %v892
        %v894 = vand.u32 %v294, 4294901760
        %v895 = vsub.f32 %v294, %v894
        %v896 = vand.u32 %v895, 4294901760
        %v897 = vsub.f32 %v895, %v896
        %v898 = vand.u32 %v897, 4294901760
        %899 = vmatprep.subr.mxu0 %v898
        %v900 = vand.u32 %v293, 4294901760
        %v901 = vsub.f32 %v293, %v900
        %v902 = vand.u32 %v901, 4294901760
        %v903 = vsub.f32 %v901, %v902
        %v904 = vand.u32 %v903, 4294901760
        %905 = vmatpush1.msra.mxu0 %v904
        %v906 = vand.u32 %v296, 4294901760
        %v907 = vsub.f32 %v296, %v906
        %v908 = vand.u32 %v907, 4294901760
        %v909 = vsub.f32 %v907, %v908
        %v910 = vand.u32 %v909, 4294901760
        %911 = vmatprep.subr.mxu0 %v910
        %v912 = vand.u32 %v295, 4294901760
        %v913 = vsub.f32 %v295, %v912
        %v914 = vand.u32 %v913, 4294901760
        %v915 = vsub.f32 %v913, %v914
        %v916 = vand.u32 %v915, 4294901760
        %917 = vmatpush1.msra.mxu0 %v916
        %v918 = vand.u32 %v298, 4294901760
        %v919 = vsub.f32 %v298, %v918
        %v920 = vand.u32 %v919, 4294901760
        %v921 = vsub.f32 %v919, %v920
        %v922 = vand.u32 %v921, 4294901760
        %923 = vmatprep.subr.mxu0 %v922
        %v924 = vand.u32 %v297, 4294901760
        %v925 = vsub.f32 %v297, %v924
        %v926 = vand.u32 %v925, 4294901760
        %v927 = vsub.f32 %v925, %v926
        %v928 = vand.u32 %v927, 4294901760
        %929 = vmatpush1.msra.mxu0 %v928
        %v930 = vand.u32 %v300, 4294901760
        %v931 = vsub.f32 %v300, %v930
        %v932 = vand.u32 %v931, 4294901760
        %v933 = vsub.f32 %v931, %v932
        %v934 = vand.u32 %v933, 4294901760
        %935 = vmatprep.subr.mxu0 %v934
        %v936 = vand.u32 %v299, 4294901760
        %v937 = vsub.f32 %v299, %v936
        %v938 = vand.u32 %v937, 4294901760
        %v939 = vsub.f32 %v937, %v938
        %v940 = vand.u32 %v939, 4294901760
        %941 = vmatpush1.msra.mxu0 %v940
        %v942 = vand.u32 %v222, 4294901760
        %943 = vmatprep.mubr.f32.mxu0 %v942
        %v944 = vand.u32 %v221, 4294901760
        %945 = vmatmul.mubr.f32.gmra.mrb[0].mxu0 %v944
        %v946 = vpop.f32.mrb[0].mxu0
        %v947 = vadd.f32 %v442, %v946
        %v948 = vpop.f32.mrb[0].mxu0
        %v949 = vadd.f32 %v444, %v948
        %v950 = vand.u32 %v224, 4294901760
        %951 = vmatprep.mubr.f32.mxu0 %v950
        %v952 = vand.u32 %v223, 4294901760
        %953 = vmatmul.mubr.f32.gmra.mrb[0].mxu0 %v952
        %v954 = vpop.f32.mrb[0].mxu0
        %v955 = vadd.f32 %v458, %v954
        %v956 = vpop.f32.mrb[0].mxu0
        %v957 = vadd.f32 %v460, %v956
        %v958 = vand.u32 %v226, 4294901760
        %959 = vmatprep.mubr.f32.mxu0 %v958
        %v960 = vand.u32 %v225, 4294901760
        %961 = vmatmul.mubr.f32.gmra.mrb[0].mxu0 %v960
        %v962 = vpop.f32.mrb[0].mxu0
        %v963 = vadd.f32 %v474, %v962
        %v964 = vpop.f32.mrb[0].mxu0
        %v965 = vadd.f32 %v476, %v964
        %v966 = vand.u32 %v228, 4294901760
        %967 = vmatprep.mubr.f32.mxu0 %v966
        %v968 = vand.u32 %v227, 4294901760
        %969 = vmatmul.mubr.f32.gmra.mrb[0].mxu0 %v968
        %v970 = vpop.f32.mrb[0].mxu0
        %v971 = vadd.f32 %v490, %v970
        %v972 = vpop.f32.mrb[0].mxu0
        %v973 = vadd.f32 %v492, %v972
        %v974 = vand.u32 %v230, 4294901760
        %975 = vmatprep.mubr.f32.mxu0 %v974
        %v976 = vand.u32 %v229, 4294901760
        %977 = vmatmul.mubr.f32.gmra.mrb[0].mxu0 %v976
        %v978 = vpop.f32.mrb[0].mxu0
        %v979 = vadd.f32 %v506, %v978
        %v980 = vpop.f32.mrb[0].mxu0
        %v981 = vadd.f32 %v508, %v980
        %v982 = vand.u32 %v232, 4294901760
        %983 = vmatprep.mubr.f32.mxu0 %v982
        %v984 = vand.u32 %v231, 4294901760
        %985 = vmatmul.mubr.f32.gmra.mrb[0].mxu0 %v984
        %v986 = vpop.f32.mrb[0].mxu0
        %v987 = vadd.f32 %v522, %v986
        %v988 = vpop.f32.mrb[0].mxu0
        %v989 = vadd.f32 %v524, %v988
        %v990 = vand.u32 %v234, 4294901760
        %991 = vmatprep.mubr.f32.mxu0 %v990
        %v992 = vand.u32 %v233, 4294901760
        %993 = vmatmul.mubr.f32.gmra.mrb[0].mxu0 %v992
        %v994 = vpop.f32.mrb[0].mxu0
        %v995 = vadd.f32 %v538, %v994
        %v996 = vpop.f32.mrb[0].mxu0
        %v997 = vadd.f32 %v540, %v996
        %v998 = vand.u32 %v236, 4294901760
        %999 = vmatprep.mubr.f32.mxu0 %v998
        %v1000 = vand.u32 %v235, 4294901760
        %1001 = vmatmul.mubr.f32.gmra.mrb[0].mxu0 %v1000
        %v1002 = vpop.f32.mrb[0].mxu0
        %v1003 = vadd.f32 %v554, %v1002
        %v1004 = vpop.f32.mrb[0].mxu0
        %v1005 = vadd.f32 %v556, %v1004
        %1006 = vdwg.mxu0
        %v1007 = vand.u32 %v238, 4294901760
        %v1008 = vsub.f32 %v238, %v1007
        %1009 = vmatprep.subr.mxu0 %v1008
        %v1010 = vand.u32 %v237, 4294901760
        %v1011 = vsub.f32 %v237, %v1010
        %1012 = vmatpush1.msra.mxu0 %v1011
        %v1013 = vand.u32 %v240, 4294901760
        %v1014 = vsub.f32 %v240, %v1013
        %1015 = vmatprep.subr.mxu0 %v1014
        %v1016 = vand.u32 %v239, 4294901760
        %v1017 = vsub.f32 %v239, %v1016
        %1018 = vmatpush1.msra.mxu0 %v1017
        %v1019 = vand.u32 %v242, 4294901760
        %v1020 = vsub.f32 %v242, %v1019
        %1021 = vmatprep.subr.mxu0 %v1020
        %v1022 = vand.u32 %v241, 4294901760
        %v1023 = vsub.f32 %v241, %v1022
        %1024 = vmatpush1.msra.mxu0 %v1023
        %v1025 = vand.u32 %v244, 4294901760
        %v1026 = vsub.f32 %v244, %v1025
        %1027 = vmatprep.subr.mxu0 %v1026
        %v1028 = vand.u32 %v243, 4294901760
        %v1029 = vsub.f32 %v243, %v1028
        %1030 = vmatpush1.msra.mxu0 %v1029
        %v1031 = vand.u32 %v246, 4294901760
        %v1032 = vsub.f32 %v246, %v1031
        %1033 = vmatprep.subr.mxu0 %v1032
        %v1034 = vand.u32 %v245, 4294901760
        %v1035 = vsub.f32 %v245, %v1034
        %1036 = vmatpush1.msra.mxu0 %v1035
        %v1037 = vand.u32 %v248, 4294901760
        %v1038 = vsub.f32 %v248, %v1037
        %1039 = vmatprep.subr.mxu0 %v1038
        %v1040 = vand.u32 %v247, 4294901760
        %v1041 = vsub.f32 %v247, %v1040
        %1042 = vmatpush1.msra.mxu0 %v1041
        %v1043 = vand.u32 %v250, 4294901760
        %v1044 = vsub.f32 %v250, %v1043
        %1045 = vmatprep.subr.mxu0 %v1044
        %v1046 = vand.u32 %v249, 4294901760
        %v1047 = vsub.f32 %v249, %v1046
        %1048 = vmatpush1.msra.mxu0 %v1047
        %v1049 = vand.u32 %v252, 4294901760
        %v1050 = vsub.f32 %v252, %v1049
        %1051 = vmatprep.subr.mxu0 %v1050
        %v1052 = vand.u32 %v251, 4294901760
        %v1053 = vsub.f32 %v251, %v1052
        %1054 = vmatpush1.msra.mxu0 %v1053
        %v1055 = vand.u32 %v254, 4294901760
        %v1056 = vsub.f32 %v254, %v1055
        %1057 = vmatprep.subr.mxu0 %v1056
        %v1058 = vand.u32 %v253, 4294901760
        %v1059 = vsub.f32 %v253, %v1058
        %1060 = vmatpush1.msra.mxu0 %v1059
        %v1061 = vand.u32 %v256, 4294901760
        %v1062 = vsub.f32 %v256, %v1061
        %1063 = vmatprep.subr.mxu0 %v1062
        %v1064 = vand.u32 %v255, 4294901760
        %v1065 = vsub.f32 %v255, %v1064
        %1066 = vmatpush1.msra.mxu0 %v1065
        %v1067 = vand.u32 %v258, 4294901760
        %v1068 = vsub.f32 %v258, %v1067
        %1069 = vmatprep.subr.mxu0 %v1068
        %v1070 = vand.u32 %v257, 4294901760
        %v1071 = vsub.f32 %v257, %v1070
        %1072 = vmatpush1.msra.mxu0 %v1071
        %v1073 = vand.u32 %v260, 4294901760
        %v1074 = vsub.f32 %v260, %v1073
        %1075 = vmatprep.subr.mxu0 %v1074
        %v1076 = vand.u32 %v259, 4294901760
        %v1077 = vsub.f32 %v259, %v1076
        %1078 = vmatpush1.msra.mxu0 %v1077
        %v1079 = vand.u32 %v262, 4294901760
        %v1080 = vsub.f32 %v262, %v1079
        %1081 = vmatprep.subr.mxu0 %v1080
        %v1082 = vand.u32 %v261, 4294901760
        %v1083 = vsub.f32 %v261, %v1082
        %1084 = vmatpush1.msra.mxu0 %v1083
        %v1085 = vand.u32 %v264, 4294901760
        %v1086 = vsub.f32 %v264, %v1085
        %1087 = vmatprep.subr.mxu0 %v1086
        %v1088 = vand.u32 %v263, 4294901760
        %v1089 = vsub.f32 %v263, %v1088
        %1090 = vmatpush1.msra.mxu0 %v1089
        %v1091 = vand.u32 %v266, 4294901760
        %v1092 = vsub.f32 %v266, %v1091
        %1093 = vmatprep.subr.mxu0 %v1092
        %v1094 = vand.u32 %v265, 4294901760
        %v1095 = vsub.f32 %v265, %v1094
        %1096 = vmatpush1.msra.mxu0 %v1095
        %v1097 = vand.u32 %v268, 4294901760
        %v1098 = vsub.f32 %v268, %v1097
        %1099 = vmatprep.subr.mxu0 %v1098
        %v1100 = vand.u32 %v267, 4294901760
        %v1101 = vsub.f32 %v267, %v1100
        %1102 = vmatpush1.msra.mxu0 %v1101
        %v1103 = vand.u32 %v270, 4294901760
        %v1104 = vsub.f32 %v270, %v1103
        %1105 = vmatprep.subr.mxu0 %v1104
        %v1106 = vand.u32 %v269, 4294901760
        %v1107 = vsub.f32 %v269, %v1106
        %1108 = vmatpush1.msra.mxu0 %v1107
        %v1109 = vand.u32 %v272, 4294901760
        %v1110 = vsub.f32 %v272, %v1109
        %1111 = vmatprep.subr.mxu0 %v1110
        %v1112 = vand.u32 %v271, 4294901760
        %v1113 = vsub.f32 %v271, %v1112
        %1114 = vmatpush1.msra.mxu0 %v1113
        %v1115 = vand.u32 %v274, 4294901760
        %v1116 = vsub.f32 %v274, %v1115
        %1117 = vmatprep.subr.mxu0 %v1116
        %v1118 = vand.u32 %v273, 4294901760
        %v1119 = vsub.f32 %v273, %v1118
        %1120 = vmatpush1.msra.mxu0 %v1119
        %v1121 = vand.u32 %v276, 4294901760
        %v1122 = vsub.f32 %v276, %v1121
        %1123 = vmatprep.subr.mxu0 %v1122
        %v1124 = vand.u32 %v275, 4294901760
        %v1125 = vsub.f32 %v275, %v1124
        %1126 = vmatpush1.msra.mxu0 %v1125
        %v1127 = vand.u32 %v278, 4294901760
        %v1128 = vsub.f32 %v278, %v1127
        %1129 = vmatprep.subr.mxu0 %v1128
        %v1130 = vand.u32 %v277, 4294901760
        %v1131 = vsub.f32 %v277, %v1130
        %1132 = vmatpush1.msra.mxu0 %v1131
        %v1133 = vand.u32 %v280, 4294901760
        %v1134 = vsub.f32 %v280, %v1133
        %1135 = vmatprep.subr.mxu0 %v1134
        %v1136 = vand.u32 %v279, 4294901760
        %v1137 = vsub.f32 %v279, %v1136
        %1138 = vmatpush1.msra.mxu0 %v1137
        %v1139 = vand.u32 %v282, 4294901760
        %v1140 = vsub.f32 %v282, %v1139
        %1141 = vmatprep.subr.mxu0 %v1140
        %v1142 = vand.u32 %v281, 4294901760
        %v1143 = vsub.f32 %v281, %v1142
        %1144 = vmatpush1.msra.mxu0 %v1143
        %v1145 = vand.u32 %v284, 4294901760
        %v1146 = vsub.f32 %v284, %v1145
        %1147 = vmatprep.subr.mxu0 %v1146
        %v1148 = vand.u32 %v283, 4294901760
        %v1149 = vsub.f32 %v283, %v1148
        %1150 = vmatpush1.msra.mxu0 %v1149
        %v1151 = vand.u32 %v286, 4294901760
        %v1152 = vsub.f32 %v286, %v1151
        %1153 = vmatprep.subr.mxu0 %v1152
        %v1154 = vand.u32 %v285, 4294901760
        %v1155 = vsub.f32 %v285, %v1154
        %1156 = vmatpush1.msra.mxu0 %v1155
        %v1157 = vand.u32 %v288, 4294901760
        %v1158 = vsub.f32 %v288, %v1157
        %1159 = vmatprep.subr.mxu0 %v1158
        %v1160 = vand.u32 %v287, 4294901760
        %v1161 = vsub.f32 %v287, %v1160
        %1162 = vmatpush1.msra.mxu0 %v1161
        %v1163 = vand.u32 %v290, 4294901760
        %v1164 = vsub.f32 %v290, %v1163
        %1165 = vmatprep.subr.mxu0 %v1164
        %v1166 = vand.u32 %v289, 4294901760
        %v1167 = vsub.f32 %v289, %v1166
        %1168 = vmatpush1.msra.mxu0 %v1167
        %v1169 = vand.u32 %v292, 4294901760
        %v1170 = vsub.f32 %v292, %v1169
        %1171 = vmatprep.subr.mxu0 %v1170
        %v1172 = vand.u32 %v291, 4294901760
        %v1173 = vsub.f32 %v291, %v1172
        %1174 = vmatpush1.msra.mxu0 %v1173
        %v1175 = vand.u32 %v294, 4294901760
        %v1176 = vsub.f32 %v294, %v1175
        %1177 = vmatprep.subr.mxu0 %v1176
        %v1178 = vand.u32 %v293, 4294901760
        %v1179 = vsub.f32 %v293, %v1178
        %1180 = vmatpush1.msra.mxu0 %v1179
        %v1181 = vand.u32 %v296, 4294901760
        %v1182 = vsub.f32 %v296, %v1181
        %1183 = vmatprep.subr.mxu0 %v1182
        %v1184 = vand.u32 %v295, 4294901760
        %v1185 = vsub.f32 %v295, %v1184
        %1186 = vmatpush1.msra.mxu0 %v1185
        %v1187 = vand.u32 %v298, 4294901760
        %v1188 = vsub.f32 %v298, %v1187
        %1189 = vmatprep.subr.mxu0 %v1188
        %v1190 = vand.u32 %v297, 4294901760
        %v1191 = vsub.f32 %v297, %v1190
        %1192 = vmatpush1.msra.mxu0 %v1191
        %v1193 = vand.u32 %v300, 4294901760
        %v1194 = vsub.f32 %v300, %v1193
        %1195 = vmatprep.subr.mxu0 %v1194
        %v1196 = vand.u32 %v299, 4294901760
        %v1197 = vsub.f32 %v299, %v1196
        %1198 = vmatpush1.msra.mxu0 %v1197
        %v1199 = vand.u32 %v222, 4294901760
        %v1200 = vsub.f32 %v222, %v1199
        %1201 = vmatprep.mubr.f32.mxu0 %v1200
        %v1202 = vand.u32 %v221, 4294901760
        %v1203 = vsub.f32 %v221, %v1202
        %1204 = vmatmul.mubr.f32.gmra.mrb[0].mxu0 %v1203
        %v1205 = vpop.f32.mrb[0].mxu0
        %v1206 = vadd.f32 %v947, %v1205
        %v1207 = vpop.f32.mrb[0].mxu0
        %v1208 = vadd.f32 %v949, %v1207
        %v1209 = vand.u32 %v224, 4294901760
        %v1210 = vsub.f32 %v224, %v1209
        %1211 = vmatprep.mubr.f32.mxu0 %v1210
        %v1212 = vand.u32 %v223, 4294901760
        %v1213 = vsub.f32 %v223, %v1212
        %1214 = vmatmul.mubr.f32.gmra.mrb[0].mxu0 %v1213
        %v1215 = vpop.f32.mrb[0].mxu0
        %v1216 = vadd.f32 %v955, %v1215
        %v1217 = vpop.f32.mrb[0].mxu0
        %v1218 = vadd.f32 %v957, %v1217
        %v1219 = vand.u32 %v226, 4294901760
        %v1220 = vsub.f32 %v226, %v1219
        %1221 = vmatprep.mubr.f32.mxu0 %v1220
        %v1222 = vand.u32 %v225, 4294901760
        %v1223 = vsub.f32 %v225, %v1222
        %1224 = vmatmul.mubr.f32.gmra.mrb[0].mxu0 %v1223
        %v1225 = vpop.f32.mrb[0].mxu0
        %v1226 = vadd.f32 %v963, %v1225
        %v1227 = vpop.f32.mrb[0].mxu0
        %v1228 = vadd.f32 %v965, %v1227
        %v1229 = vand.u32 %v228, 4294901760
        %v1230 = vsub.f32 %v228, %v1229
        %1231 = vmatprep.mubr.f32.mxu0 %v1230
        %v1232 = vand.u32 %v227, 4294901760
        %v1233 = vsub.f32 %v227, %v1232
        %1234 = vmatmul.mubr.f32.gmra.mrb[0].mxu0 %v1233
        %v1235 = vpop.f32.mrb[0].mxu0
        %v1236 = vadd.f32 %v971, %v1235
        %v1237 = vpop.f32.mrb[0].mxu0
        %v1238 = vadd.f32 %v973, %v1237
        %v1239 = vand.u32 %v230, 4294901760
        %v1240 = vsub.f32 %v230, %v1239
        %1241 = vmatprep.mubr.f32.mxu0 %v1240
        %v1242 = vand.u32 %v229, 4294901760
        %v1243 = vsub.f32 %v229, %v1242
        %1244 = vmatmul.mubr.f32.gmra.mrb[0].mxu0 %v1243
        %v1245 = vpop.f32.mrb[0].mxu0
        %v1246 = vadd.f32 %v979, %v1245
        %v1247 = vpop.f32.mrb[0].mxu0
        %v1248 = vadd.f32 %v981, %v1247
        %v1249 = vand.u32 %v232, 4294901760
        %v1250 = vsub.f32 %v232, %v1249
        %1251 = vmatprep.mubr.f32.mxu0 %v1250
        %v1252 = vand.u32 %v231, 4294901760
        %v1253 = vsub.f32 %v231, %v1252
        %1254 = vmatmul.mubr.f32.gmra.mrb[0].mxu0 %v1253
        %v1255 = vpop.f32.mrb[0].mxu0
        %v1256 = vadd.f32 %v987, %v1255
        %v1257 = vpop.f32.mrb[0].mxu0
        %v1258 = vadd.f32 %v989, %v1257
        %v1259 = vand.u32 %v234, 4294901760
        %v1260 = vsub.f32 %v234, %v1259
        %1261 = vmatprep.mubr.f32.mxu0 %v1260
        %v1262 = vand.u32 %v233, 4294901760
        %v1263 = vsub.f32 %v233, %v1262
        %1264 = vmatmul.mubr.f32.gmra.mrb[0].mxu0 %v1263
        %v1265 = vpop.f32.mrb[0].mxu0
        %v1266 = vadd.f32 %v995, %v1265
        %v1267 = vpop.f32.mrb[0].mxu0
        %v1268 = vadd.f32 %v997, %v1267
        %v1269 = vand.u32 %v236, 4294901760
        %v1270 = vsub.f32 %v236, %v1269
        %1271 = vmatprep.mubr.f32.mxu0 %v1270
        %v1272 = vand.u32 %v235, 4294901760
        %v1273 = vsub.f32 %v235, %v1272
        %1274 = vmatmul.mubr.f32.gmra.mrb[0].mxu0 %v1273
        %v1275 = vpop.f32.mrb[0].mxu0
        %v1276 = vadd.f32 %v1003, %v1275
        %v1277 = vpop.f32.mrb[0].mxu0
        %v1278 = vadd.f32 %v1005, %v1277
        %1279 = vdwg.mxu0
        %v1280 = vand.u32 %v238, 4294901760
        %1281 = vmatprep.subr.mxu0 %v1280
        %v1282 = vand.u32 %v237, 4294901760
        %1283 = vmatpush1.msra.mxu0 %v1282
        %v1284 = vand.u32 %v240, 4294901760
        %1285 = vmatprep.subr.mxu0 %v1284
        %v1286 = vand.u32 %v239, 4294901760
        %1287 = vmatpush1.msra.mxu0 %v1286
        %v1288 = vand.u32 %v242, 4294901760
        %1289 = vmatprep.subr.mxu0 %v1288
        %v1290 = vand.u32 %v241, 4294901760
        %1291 = vmatpush1.msra.mxu0 %v1290
        %v1292 = vand.u32 %v244, 4294901760
        %1293 = vmatprep.subr.mxu0 %v1292
        %v1294 = vand.u32 %v243, 4294901760
        %1295 = vmatpush1.msra.mxu0 %v1294
        %v1296 = vand.u32 %v246, 4294901760
        %1297 = vmatprep.subr.mxu0 %v1296
        %v1298 = vand.u32 %v245, 4294901760
        %1299 = vmatpush1.msra.mxu0 %v1298
        %v1300 = vand.u32 %v248, 4294901760
        %1301 = vmatprep.subr.mxu0 %v1300
        %v1302 = vand.u32 %v247, 4294901760
        %1303 = vmatpush1.msra.mxu0 %v1302
        %v1304 = vand.u32 %v250, 4294901760
        %1305 = vmatprep.subr.mxu0 %v1304
        %v1306 = vand.u32 %v249, 4294901760
        %1307 = vmatpush1.msra.mxu0 %v1306
        %v1308 = vand.u32 %v252, 4294901760
        %1309 = vmatprep.subr.mxu0 %v1308
        %v1310 = vand.u32 %v251, 4294901760
        %1311 = vmatpush1.msra.mxu0 %v1310
        %v1312 = vand.u32 %v254, 4294901760
        %1313 = vmatprep.subr.mxu0 %v1312
        %v1314 = vand.u32 %v253, 4294901760
        %1315 = vmatpush1.msra.mxu0 %v1314
        %v1316 = vand.u32 %v256, 4294901760
        %1317 = vmatprep.subr.mxu0 %v1316
        %v1318 = vand.u32 %v255, 4294901760
        %1319 = vmatpush1.msra.mxu0 %v1318
        %v1320 = vand.u32 %v258, 4294901760
        %1321 = vmatprep.subr.mxu0 %v1320
        %v1322 = vand.u32 %v257, 4294901760
        %1323 = vmatpush1.msra.mxu0 %v1322
        %v1324 = vand.u32 %v260, 4294901760
        %1325 = vmatprep.subr.mxu0 %v1324
        %v1326 = vand.u32 %v259, 4294901760
        %1327 = vmatpush1.msra.mxu0 %v1326
        %v1328 = vand.u32 %v262, 4294901760
        %1329 = vmatprep.subr.mxu0 %v1328
        %v1330 = vand.u32 %v261, 4294901760
        %1331 = vmatpush1.msra.mxu0 %v1330
        %v1332 = vand.u32 %v264, 4294901760
        %1333 = vmatprep.subr.mxu0 %v1332
        %v1334 = vand.u32 %v263, 4294901760
        %1335 = vmatpush1.msra.mxu0 %v1334
        %v1336 = vand.u32 %v266, 4294901760
        %1337 = vmatprep.subr.mxu0 %v1336
        %v1338 = vand.u32 %v265, 4294901760
        %1339 = vmatpush1.msra.mxu0 %v1338
        %v1340 = vand.u32 %v268, 4294901760
        %1341 = vmatprep.subr.mxu0 %v1340
        %v1342 = vand.u32 %v267, 4294901760
        %1343 = vmatpush1.msra.mxu0 %v1342
        %v1344 = vand.u32 %v270, 4294901760
        %1345 = vmatprep.subr.mxu0 %v1344
        %v1346 = vand.u32 %v269, 4294901760
        %1347 = vmatpush1.msra.mxu0 %v1346
        %v1348 = vand.u32 %v272, 4294901760
        %1349 = vmatprep.subr.mxu0 %v1348
        %v1350 = vand.u32 %v271, 4294901760
        %1351 = vmatpush1.msra.mxu0 %v1350
        %v1352 = vand.u32 %v274, 4294901760
        %1353 = vmatprep.subr.mxu0 %v1352
        %v1354 = vand.u32 %v273, 4294901760
        %1355 = vmatpush1.msra.mxu0 %v1354
        %v1356 = vand.u32 %v276, 4294901760
        %1357 = vmatprep.subr.mxu0 %v1356
        %v1358 = vand.u32 %v275, 4294901760
        %1359 = vmatpush1.msra.mxu0 %v1358
        %v1360 = vand.u32 %v278, 4294901760
        %1361 = vmatprep.subr.mxu0 %v1360
        %v1362 = vand.u32 %v277, 4294901760
        %1363 = vmatpush1.msra.mxu0 %v1362
        %v1364 = vand.u32 %v280, 4294901760
        %1365 = vmatprep.subr.mxu0 %v1364
        %v1366 = vand.u32 %v279, 4294901760
        %1367 = vmatpush1.msra.mxu0 %v1366
        %v1368 = vand.u32 %v282, 4294901760
        %1369 = vmatprep.subr.mxu0 %v1368
        %v1370 = vand.u32 %v281, 4294901760
        %1371 = vmatpush1.msra.mxu0 %v1370
        %v1372 = vand.u32 %v284, 4294901760
        %1373 = vmatprep.subr.mxu0 %v1372
        %v1374 = vand.u32 %v283, 4294901760
        %1375 = vmatpush1.msra.mxu0 %v1374
        %v1376 = vand.u32 %v286, 4294901760
        %1377 = vmatprep.subr.mxu0 %v1376
        %v1378 = vand.u32 %v285, 4294901760
        %1379 = vmatpush1.msra.mxu0 %v1378
        %v1380 = vand.u32 %v288, 4294901760
        %1381 = vmatprep.subr.mxu0 %v1380
        %v1382 = vand.u32 %v287, 4294901760
        %1383 = vmatpush1.msra.mxu0 %v1382
        %v1384 = vand.u32 %v290, 4294901760
        %1385 = vmatprep.subr.mxu0 %v1384
        %v1386 = vand.u32 %v289, 4294901760
        %1387 = vmatpush1.msra.mxu0 %v1386
        %v1388 = vand.u32 %v292, 4294901760
        %1389 = vmatprep.subr.mxu0 %v1388
        %v1390 = vand.u32 %v291, 4294901760
        %1391 = vmatpush1.msra.mxu0 %v1390
        %v1392 = vand.u32 %v294, 4294901760
        %1393 = vmatprep.subr.mxu0 %v1392
        %v1394 = vand.u32 %v293, 4294901760
        %1395 = vmatpush1.msra.mxu0 %v1394
        %v1396 = vand.u32 %v296, 4294901760
        %1397 = vmatprep.subr.mxu0 %v1396
        %v1398 = vand.u32 %v295, 4294901760
        %1399 = vmatpush1.msra.mxu0 %v1398
        %v1400 = vand.u32 %v298, 4294901760
        %1401 = vmatprep.subr.mxu0 %v1400
        %v1402 = vand.u32 %v297, 4294901760
        %1403 = vmatpush1.msra.mxu0 %v1402
        %v1404 = vand.u32 %v300, 4294901760
        %1405 = vmatprep.subr.mxu0 %v1404
        %v1406 = vand.u32 %v299, 4294901760
        %1407 = vmatpush1.msra.mxu0 %v1406
        %v1408 = vand.u32 %v222, 4294901760
        %v1409 = vsub.f32 %v222, %v1408
        %v1410 = vand.u32 %v1409, 4294901760
        %1411 = vmatprep.mubr.f32.mxu0 %v1410
        %v1412 = vand.u32 %v221, 4294901760
        %v1413 = vsub.f32 %v221, %v1412
        %v1414 = vand.u32 %v1413, 4294901760
        %1415 = vmatmul.mubr.f32.gmra.mrb[0].mxu0 %v1414
        %v1416 = vpop.f32.mrb[0].mxu0
        %v1417 = vadd.f32 %v1206, %v1416
        %v1418 = vpop.f32.mrb[0].mxu0
        %v1419 = vadd.f32 %v1208, %v1418
        %v1420 = vand.u32 %v224, 4294901760
        %v1421 = vsub.f32 %v224, %v1420
        %v1422 = vand.u32 %v1421, 4294901760
        %1423 = vmatprep.mubr.f32.mxu0 %v1422
        %v1424 = vand.u32 %v223, 4294901760
        %v1425 = vsub.f32 %v223, %v1424
        %v1426 = vand.u32 %v1425, 4294901760
        %1427 = vmatmul.mubr.f32.gmra.mrb[0].mxu0 %v1426
        %v1428 = vpop.f32.mrb[0].mxu0
        %v1429 = vadd.f32 %v1216, %v1428
        %v1430 = vpop.f32.mrb[0].mxu0
        %v1431 = vadd.f32 %v1218, %v1430
        %v1432 = vand.u32 %v226, 4294901760
        %v1433 = vsub.f32 %v226, %v1432
        %v1434 = vand.u32 %v1433, 4294901760
        %1435 = vmatprep.mubr.f32.mxu0 %v1434
        %v1436 = vand.u32 %v225, 4294901760
        %v1437 = vsub.f32 %v225, %v1436
        %v1438 = vand.u32 %v1437, 4294901760
        %1439 = vmatmul.mubr.f32.gmra.mrb[0].mxu0 %v1438
        %v1440 = vpop.f32.mrb[0].mxu0
        %v1441 = vadd.f32 %v1226, %v1440
        %v1442 = vpop.f32.mrb[0].mxu0
        %v1443 = vadd.f32 %v1228, %v1442
        %v1444 = vand.u32 %v228, 4294901760
        %v1445 = vsub.f32 %v228, %v1444
        %v1446 = vand.u32 %v1445, 4294901760
        %1447 = vmatprep.mubr.f32.mxu0 %v1446
        %v1448 = vand.u32 %v227, 4294901760
        %v1449 = vsub.f32 %v227, %v1448
        %v1450 = vand.u32 %v1449, 4294901760
        %1451 = vmatmul.mubr.f32.gmra.mrb[0].mxu0 %v1450
        %v1452 = vpop.f32.mrb[0].mxu0
        %v1453 = vadd.f32 %v1236, %v1452
        %v1454 = vpop.f32.mrb[0].mxu0
        %v1455 = vadd.f32 %v1238, %v1454
        %v1456 = vand.u32 %v230, 4294901760
        %v1457 = vsub.f32 %v230, %v1456
        %v1458 = vand.u32 %v1457, 4294901760
        %1459 = vmatprep.mubr.f32.mxu0 %v1458
        %v1460 = vand.u32 %v229, 4294901760
        %v1461 = vsub.f32 %v229, %v1460
        %v1462 = vand.u32 %v1461, 4294901760
        %1463 = vmatmul.mubr.f32.gmra.mrb[0].mxu0 %v1462
        %v1464 = vpop.f32.mrb[0].mxu0
        %v1465 = vadd.f32 %v1246, %v1464
        %v1466 = vpop.f32.mrb[0].mxu0
        %v1467 = vadd.f32 %v1248, %v1466
        %v1468 = vand.u32 %v232, 4294901760
        %v1469 = vsub.f32 %v232, %v1468
        %v1470 = vand.u32 %v1469, 4294901760
        %1471 = vmatprep.mubr.f32.mxu0 %v1470
        %v1472 = vand.u32 %v231, 4294901760
        %v1473 = vsub.f32 %v231, %v1472
        %v1474 = vand.u32 %v1473, 4294901760
        %1475 = vmatmul.mubr.f32.gmra.mrb[0].mxu0 %v1474
        %v1476 = vpop.f32.mrb[0].mxu0
        %v1477 = vadd.f32 %v1256, %v1476
        %v1478 = vpop.f32.mrb[0].mxu0
        %v1479 = vadd.f32 %v1258, %v1478
        %v1480 = vand.u32 %v234, 4294901760
        %v1481 = vsub.f32 %v234, %v1480
        %v1482 = vand.u32 %v1481, 4294901760
        %1483 = vmatprep.mubr.f32.mxu0 %v1482
        %v1484 = vand.u32 %v233, 4294901760
        %v1485 = vsub.f32 %v233, %v1484
        %v1486 = vand.u32 %v1485, 4294901760
        %1487 = vmatmul.mubr.f32.gmra.mrb[0].mxu0 %v1486
        %v1488 = vpop.f32.mrb[0].mxu0
        %v1489 = vadd.f32 %v1266, %v1488
        %v1490 = vpop.f32.mrb[0].mxu0
        %v1491 = vadd.f32 %v1268, %v1490
        %v1492 = vand.u32 %v236, 4294901760
        %v1493 = vsub.f32 %v236, %v1492
        %v1494 = vand.u32 %v1493, 4294901760
        %1495 = vmatprep.mubr.f32.mxu0 %v1494
        %v1496 = vand.u32 %v235, 4294901760
        %v1497 = vsub.f32 %v235, %v1496
        %v1498 = vand.u32 %v1497, 4294901760
        %1499 = vmatmul.mubr.f32.gmra.mrb[0].mxu0 %v1498
        %v1500 = vpop.f32.mrb[0].mxu0
        %v1501 = vadd.f32 %v1276, %v1500
        %v1502 = vpop.f32.mrb[0].mxu0
        %v1503 = vadd.f32 %v1278, %v1502
        %1504 = vdwg.mxu0
        %v1505 = vand.u32 %v238, 4294901760
        %v1506 = vsub.f32 %v238, %v1505
        %v1507 = vand.u32 %v1506, 4294901760
        %1508 = vmatprep.subr.mxu0 %v1507
        %v1509 = vand.u32 %v237, 4294901760
        %v1510 = vsub.f32 %v237, %v1509
        %v1511 = vand.u32 %v1510, 4294901760
        %1512 = vmatpush1.msra.mxu0 %v1511
        %v1513 = vand.u32 %v240, 4294901760
        %v1514 = vsub.f32 %v240, %v1513
        %v1515 = vand.u32 %v1514, 4294901760
        %1516 = vmatprep.subr.mxu0 %v1515
        %v1517 = vand.u32 %v239, 4294901760
        %v1518 = vsub.f32 %v239, %v1517
        %v1519 = vand.u32 %v1518, 4294901760
        %1520 = vmatpush1.msra.mxu0 %v1519
        %v1521 = vand.u32 %v242, 4294901760
        %v1522 = vsub.f32 %v242, %v1521
        %v1523 = vand.u32 %v1522, 4294901760
        %1524 = vmatprep.subr.mxu0 %v1523
        %v1525 = vand.u32 %v241, 4294901760
        %v1526 = vsub.f32 %v241, %v1525
        %v1527 = vand.u32 %v1526, 4294901760
        %1528 = vmatpush1.msra.mxu0 %v1527
        %v1529 = vand.u32 %v244, 4294901760
        %v1530 = vsub.f32 %v244, %v1529
        %v1531 = vand.u32 %v1530, 4294901760
        %1532 = vmatprep.subr.mxu0 %v1531
        %v1533 = vand.u32 %v243, 4294901760
        %v1534 = vsub.f32 %v243, %v1533
        %v1535 = vand.u32 %v1534, 4294901760
        %1536 = vmatpush1.msra.mxu0 %v1535
        %v1537 = vand.u32 %v246, 4294901760
        %v1538 = vsub.f32 %v246, %v1537
        %v1539 = vand.u32 %v1538, 4294901760
        %1540 = vmatprep.subr.mxu0 %v1539
        %v1541 = vand.u32 %v245, 4294901760
        %v1542 = vsub.f32 %v245, %v1541
        %v1543 = vand.u32 %v1542, 4294901760
        %1544 = vmatpush1.msra.mxu0 %v1543
        %v1545 = vand.u32 %v248, 4294901760
        %v1546 = vsub.f32 %v248, %v1545
        %v1547 = vand.u32 %v1546, 4294901760
        %1548 = vmatprep.subr.mxu0 %v1547
        %v1549 = vand.u32 %v247, 4294901760
        %v1550 = vsub.f32 %v247, %v1549
        %v1551 = vand.u32 %v1550, 4294901760
        %1552 = vmatpush1.msra.mxu0 %v1551
        %v1553 = vand.u32 %v250, 4294901760
        %v1554 = vsub.f32 %v250, %v1553
        %v1555 = vand.u32 %v1554, 4294901760
        %1556 = vmatprep.subr.mxu0 %v1555
        %v1557 = vand.u32 %v249, 4294901760
        %v1558 = vsub.f32 %v249, %v1557
        %v1559 = vand.u32 %v1558, 4294901760
        %1560 = vmatpush1.msra.mxu0 %v1559
        %v1561 = vand.u32 %v252, 4294901760
        %v1562 = vsub.f32 %v252, %v1561
        %v1563 = vand.u32 %v1562, 4294901760
        %1564 = vmatprep.subr.mxu0 %v1563
        %v1565 = vand.u32 %v251, 4294901760
        %v1566 = vsub.f32 %v251, %v1565
        %v1567 = vand.u32 %v1566, 4294901760
        %1568 = vmatpush1.msra.mxu0 %v1567
        %v1569 = vand.u32 %v254, 4294901760
        %v1570 = vsub.f32 %v254, %v1569
        %v1571 = vand.u32 %v1570, 4294901760
        %1572 = vmatprep.subr.mxu0 %v1571
        %v1573 = vand.u32 %v253, 4294901760
        %v1574 = vsub.f32 %v253, %v1573
        %v1575 = vand.u32 %v1574, 4294901760
        %1576 = vmatpush1.msra.mxu0 %v1575
        %v1577 = vand.u32 %v256, 4294901760
        %v1578 = vsub.f32 %v256, %v1577
        %v1579 = vand.u32 %v1578, 4294901760
        %1580 = vmatprep.subr.mxu0 %v1579
        %v1581 = vand.u32 %v255, 4294901760
        %v1582 = vsub.f32 %v255, %v1581
        %v1583 = vand.u32 %v1582, 4294901760
        %1584 = vmatpush1.msra.mxu0 %v1583
        %v1585 = vand.u32 %v258, 4294901760
        %v1586 = vsub.f32 %v258, %v1585
        %v1587 = vand.u32 %v1586, 4294901760
        %1588 = vmatprep.subr.mxu0 %v1587
        %v1589 = vand.u32 %v257, 4294901760
        %v1590 = vsub.f32 %v257, %v1589
        %v1591 = vand.u32 %v1590, 4294901760
        %1592 = vmatpush1.msra.mxu0 %v1591
        %v1593 = vand.u32 %v260, 4294901760
        %v1594 = vsub.f32 %v260, %v1593
        %v1595 = vand.u32 %v1594, 4294901760
        %1596 = vmatprep.subr.mxu0 %v1595
        %v1597 = vand.u32 %v259, 4294901760
        %v1598 = vsub.f32 %v259, %v1597
        %v1599 = vand.u32 %v1598, 4294901760
        %1600 = vmatpush1.msra.mxu0 %v1599
        %v1601 = vand.u32 %v262, 4294901760
        %v1602 = vsub.f32 %v262, %v1601
        %v1603 = vand.u32 %v1602, 4294901760
        %1604 = vmatprep.subr.mxu0 %v1603
        %v1605 = vand.u32 %v261, 4294901760
        %v1606 = vsub.f32 %v261, %v1605
        %v1607 = vand.u32 %v1606, 4294901760
        %1608 = vmatpush1.msra.mxu0 %v1607
        %v1609 = vand.u32 %v264, 4294901760
        %v1610 = vsub.f32 %v264, %v1609
        %v1611 = vand.u32 %v1610, 4294901760
        %1612 = vmatprep.subr.mxu0 %v1611
        %v1613 = vand.u32 %v263, 4294901760
        %v1614 = vsub.f32 %v263, %v1613
        %v1615 = vand.u32 %v1614, 4294901760
        %1616 = vmatpush1.msra.mxu0 %v1615
        %v1617 = vand.u32 %v266, 4294901760
        %v1618 = vsub.f32 %v266, %v1617
        %v1619 = vand.u32 %v1618, 4294901760
        %1620 = vmatprep.subr.mxu0 %v1619
        %v1621 = vand.u32 %v265, 4294901760
        %v1622 = vsub.f32 %v265, %v1621
        %v1623 = vand.u32 %v1622, 4294901760
        %1624 = vmatpush1.msra.mxu0 %v1623
        %v1625 = vand.u32 %v268, 4294901760
        %v1626 = vsub.f32 %v268, %v1625
        %v1627 = vand.u32 %v1626, 4294901760
        %1628 = vmatprep.subr.mxu0 %v1627
        %v1629 = vand.u32 %v267, 4294901760
        %v1630 = vsub.f32 %v267, %v1629
        %v1631 = vand.u32 %v1630, 4294901760
        %1632 = vmatpush1.msra.mxu0 %v1631
        %v1633 = vand.u32 %v270, 4294901760
        %v1634 = vsub.f32 %v270, %v1633
        %v1635 = vand.u32 %v1634, 4294901760
        %1636 = vmatprep.subr.mxu0 %v1635
        %v1637 = vand.u32 %v269, 4294901760
        %v1638 = vsub.f32 %v269, %v1637
        %v1639 = vand.u32 %v1638, 4294901760
        %1640 = vmatpush1.msra.mxu0 %v1639
        %v1641 = vand.u32 %v272, 4294901760
        %v1642 = vsub.f32 %v272, %v1641
        %v1643 = vand.u32 %v1642, 4294901760
        %1644 = vmatprep.subr.mxu0 %v1643
        %v1645 = vand.u32 %v271, 4294901760
        %v1646 = vsub.f32 %v271, %v1645
        %v1647 = vand.u32 %v1646, 4294901760
        %1648 = vmatpush1.msra.mxu0 %v1647
        %v1649 = vand.u32 %v274, 4294901760
        %v1650 = vsub.f32 %v274, %v1649
        %v1651 = vand.u32 %v1650, 4294901760
        %1652 = vmatprep.subr.mxu0 %v1651
        %v1653 = vand.u32 %v273, 4294901760
        %v1654 = vsub.f32 %v273, %v1653
        %v1655 = vand.u32 %v1654, 4294901760
        %1656 = vmatpush1.msra.mxu0 %v1655
        %v1657 = vand.u32 %v276, 4294901760
        %v1658 = vsub.f32 %v276, %v1657
        %v1659 = vand.u32 %v1658, 4294901760
        %1660 = vmatprep.subr.mxu0 %v1659
        %v1661 = vand.u32 %v275, 4294901760
        %v1662 = vsub.f32 %v275, %v1661
        %v1663 = vand.u32 %v1662, 4294901760
        %1664 = vmatpush1.msra.mxu0 %v1663
        %v1665 = vand.u32 %v278, 4294901760
        %v1666 = vsub.f32 %v278, %v1665
        %v1667 = vand.u32 %v1666, 4294901760
        %1668 = vmatprep.subr.mxu0 %v1667
        %v1669 = vand.u32 %v277, 4294901760
        %v1670 = vsub.f32 %v277, %v1669
        %v1671 = vand.u32 %v1670, 4294901760
        %1672 = vmatpush1.msra.mxu0 %v1671
        %v1673 = vand.u32 %v280, 4294901760
        %v1674 = vsub.f32 %v280, %v1673
        %v1675 = vand.u32 %v1674, 4294901760
        %1676 = vmatprep.subr.mxu0 %v1675
        %v1677 = vand.u32 %v279, 4294901760
        %v1678 = vsub.f32 %v279, %v1677
        %v1679 = vand.u32 %v1678, 4294901760
        %1680 = vmatpush1.msra.mxu0 %v1679
        %v1681 = vand.u32 %v282, 4294901760
        %v1682 = vsub.f32 %v282, %v1681
        %v1683 = vand.u32 %v1682, 4294901760
        %1684 = vmatprep.subr.mxu0 %v1683
        %v1685 = vand.u32 %v281, 4294901760
        %v1686 = vsub.f32 %v281, %v1685
        %v1687 = vand.u32 %v1686, 4294901760
        %1688 = vmatpush1.msra.mxu0 %v1687
        %v1689 = vand.u32 %v284, 4294901760
        %v1690 = vsub.f32 %v284, %v1689
        %v1691 = vand.u32 %v1690, 4294901760
        %1692 = vmatprep.subr.mxu0 %v1691
        %v1693 = vand.u32 %v283, 4294901760
        %v1694 = vsub.f32 %v283, %v1693
        %v1695 = vand.u32 %v1694, 4294901760
        %1696 = vmatpush1.msra.mxu0 %v1695
        %v1697 = vand.u32 %v286, 4294901760
        %v1698 = vsub.f32 %v286, %v1697
        %v1699 = vand.u32 %v1698, 4294901760
        %1700 = vmatprep.subr.mxu0 %v1699
        %v1701 = vand.u32 %v285, 4294901760
        %v1702 = vsub.f32 %v285, %v1701
        %v1703 = vand.u32 %v1702, 4294901760
        %1704 = vmatpush1.msra.mxu0 %v1703
        %v1705 = vand.u32 %v288, 4294901760
        %v1706 = vsub.f32 %v288, %v1705
        %v1707 = vand.u32 %v1706, 4294901760
        %1708 = vmatprep.subr.mxu0 %v1707
        %v1709 = vand.u32 %v287, 4294901760
        %v1710 = vsub.f32 %v287, %v1709
        %v1711 = vand.u32 %v1710, 4294901760
        %1712 = vmatpush1.msra.mxu0 %v1711
        %v1713 = vand.u32 %v290, 4294901760
        %v1714 = vsub.f32 %v290, %v1713
        %v1715 = vand.u32 %v1714, 4294901760
        %1716 = vmatprep.subr.mxu0 %v1715
        %v1717 = vand.u32 %v289, 4294901760
        %v1718 = vsub.f32 %v289, %v1717
        %v1719 = vand.u32 %v1718, 4294901760
        %1720 = vmatpush1.msra.mxu0 %v1719
        %v1721 = vand.u32 %v292, 4294901760
        %v1722 = vsub.f32 %v292, %v1721
        %v1723 = vand.u32 %v1722, 4294901760
        %1724 = vmatprep.subr.mxu0 %v1723
        %v1725 = vand.u32 %v291, 4294901760
        %v1726 = vsub.f32 %v291, %v1725
        %v1727 = vand.u32 %v1726, 4294901760
        %1728 = vmatpush1.msra.mxu0 %v1727
        %v1729 = vand.u32 %v294, 4294901760
        %v1730 = vsub.f32 %v294, %v1729
        %v1731 = vand.u32 %v1730, 4294901760
        %1732 = vmatprep.subr.mxu0 %v1731
        %v1733 = vand.u32 %v293, 4294901760
        %v1734 = vsub.f32 %v293, %v1733
        %v1735 = vand.u32 %v1734, 4294901760
        %1736 = vmatpush1.msra.mxu0 %v1735
        %v1737 = vand.u32 %v296, 4294901760
        %v1738 = vsub.f32 %v296, %v1737
        %v1739 = vand.u32 %v1738, 4294901760
        %1740 = vmatprep.subr.mxu0 %v1739
        %v1741 = vand.u32 %v295, 4294901760
        %v1742 = vsub.f32 %v295, %v1741
        %v1743 = vand.u32 %v1742, 4294901760
        %1744 = vmatpush1.msra.mxu0 %v1743
        %v1745 = vand.u32 %v298, 4294901760
        %v1746 = vsub.f32 %v298, %v1745
        %v1747 = vand.u32 %v1746, 4294901760
        %1748 = vmatprep.subr.mxu0 %v1747
        %v1749 = vand.u32 %v297, 4294901760
        %v1750 = vsub.f32 %v297, %v1749
        %v1751 = vand.u32 %v1750, 4294901760
        %1752 = vmatpush1.msra.mxu0 %v1751
        %v1753 = vand.u32 %v300, 4294901760
        %v1754 = vsub.f32 %v300, %v1753
        %v1755 = vand.u32 %v1754, 4294901760
        %1756 = vmatprep.subr.mxu0 %v1755
        %v1757 = vand.u32 %v299, 4294901760
        %v1758 = vsub.f32 %v299, %v1757
        %v1759 = vand.u32 %v1758, 4294901760
        %1760 = vmatpush1.msra.mxu0 %v1759
        %v1761 = vand.u32 %v222, 4294901760
        %1762 = vmatprep.mubr.f32.mxu0 %v1761
        %v1763 = vand.u32 %v221, 4294901760
        %1764 = vmatmul.mubr.f32.gmra.mrb[0].mxu0 %v1763
        %v1765 = vpop.f32.mrb[0].mxu0
        %v1766 = vadd.f32 %v1417, %v1765
        %v1767 = vpop.f32.mrb[0].mxu0
        %v1768 = vadd.f32 %v1419, %v1767
        %v1769 = vand.u32 %v224, 4294901760
        %1770 = vmatprep.mubr.f32.mxu0 %v1769
        %v1771 = vand.u32 %v223, 4294901760
        %1772 = vmatmul.mubr.f32.gmra.mrb[0].mxu0 %v1771
        %v1773 = vpop.f32.mrb[0].mxu0
        %v1774 = vadd.f32 %v1429, %v1773
        %v1775 = vpop.f32.mrb[0].mxu0
        %v1776 = vadd.f32 %v1431, %v1775
        %v1777 = vand.u32 %v226, 4294901760
        %1778 = vmatprep.mubr.f32.mxu0 %v1777
        %v1779 = vand.u32 %v225, 4294901760
        %1780 = vmatmul.mubr.f32.gmra.mrb[0].mxu0 %v1779
        %v1781 = vpop.f32.mrb[0].mxu0
        %v1782 = vadd.f32 %v1441, %v1781
        %v1783 = vpop.f32.mrb[0].mxu0
        %v1784 = vadd.f32 %v1443, %v1783
        %v1785 = vand.u32 %v228, 4294901760
        %1786 = vmatprep.mubr.f32.mxu0 %v1785
        %v1787 = vand.u32 %v227, 4294901760
        %1788 = vmatmul.mubr.f32.gmra.mrb[0].mxu0 %v1787
        %v1789 = vpop.f32.mrb[0].mxu0
        %v1790 = vadd.f32 %v1453, %v1789
        %v1791 = vpop.f32.mrb[0].mxu0
        %v1792 = vadd.f32 %v1455, %v1791
        %v1793 = vand.u32 %v230, 4294901760
        %1794 = vmatprep.mubr.f32.mxu0 %v1793
        %v1795 = vand.u32 %v229, 4294901760
        %1796 = vmatmul.mubr.f32.gmra.mrb[0].mxu0 %v1795
        %v1797 = vpop.f32.mrb[0].mxu0
        %v1798 = vadd.f32 %v1465, %v1797
        %v1799 = vpop.f32.mrb[0].mxu0
        %v1800 = vadd.f32 %v1467, %v1799
        %v1801 = vand.u32 %v232, 4294901760
        %1802 = vmatprep.mubr.f32.mxu0 %v1801
        %v1803 = vand.u32 %v231, 4294901760
        %1804 = vmatmul.mubr.f32.gmra.mrb[0].mxu0 %v1803
        %v1805 = vpop.f32.mrb[0].mxu0
        %v1806 = vadd.f32 %v1477, %v1805
        %v1807 = vpop.f32.mrb[0].mxu0
        %v1808 = vadd.f32 %v1479, %v1807
        %v1809 = vand.u32 %v234, 4294901760
        %1810 = vmatprep.mubr.f32.mxu0 %v1809
        %v1811 = vand.u32 %v233, 4294901760
        %1812 = vmatmul.mubr.f32.gmra.mrb[0].mxu0 %v1811
        %v1813 = vpop.f32.mrb[0].mxu0
        %v1814 = vadd.f32 %v1489, %v1813
        %v1815 = vpop.f32.mrb[0].mxu0
        %v1816 = vadd.f32 %v1491, %v1815
        %v1817 = vand.u32 %v236, 4294901760
        %1818 = vmatprep.mubr.f32.mxu0 %v1817
        %v1819 = vand.u32 %v235, 4294901760
        %1820 = vmatmul.mubr.f32.gmra.mrb[0].mxu0 %v1819
        %v1821 = vpop.f32.mrb[0].mxu0
        %v1822 = vadd.f32 %v1501, %v1821
        %v1823 = vpop.f32.mrb[0].mxu0
        %v1824 = vadd.f32 %v1503, %v1823
        %1825 = vdwg.mxu0
        %v1826 = vand.u32 %v238, 4294901760
        %1827 = vmatprep.subr.mxu0 %v1826
        %v1828 = vand.u32 %v237, 4294901760
        %1829 = vmatpush1.msra.mxu0 %v1828
        %v1830 = vand.u32 %v240, 4294901760
        %1831 = vmatprep.subr.mxu0 %v1830
        %v1832 = vand.u32 %v239, 4294901760
        %1833 = vmatpush1.msra.mxu0 %v1832
        %v1834 = vand.u32 %v242, 4294901760
        %1835 = vmatprep.subr.mxu0 %v1834
        %v1836 = vand.u32 %v241, 4294901760
        %1837 = vmatpush1.msra.mxu0 %v1836
        %v1838 = vand.u32 %v244, 4294901760
        %1839 = vmatprep.subr.mxu0 %v1838
        %v1840 = vand.u32 %v243, 4294901760
        %1841 = vmatpush1.msra.mxu0 %v1840
        %v1842 = vand.u32 %v246, 4294901760
        %1843 = vmatprep.subr.mxu0 %v1842
        %v1844 = vand.u32 %v245, 4294901760
        %1845 = vmatpush1.msra.mxu0 %v1844
        %v1846 = vand.u32 %v248, 4294901760
        %1847 = vmatprep.subr.mxu0 %v1846
        %v1848 = vand.u32 %v247, 4294901760
        %1849 = vmatpush1.msra.mxu0 %v1848
        %v1850 = vand.u32 %v250, 4294901760
        %1851 = vmatprep.subr.mxu0 %v1850
        %v1852 = vand.u32 %v249, 4294901760
        %1853 = vmatpush1.msra.mxu0 %v1852
        %v1854 = vand.u32 %v252, 4294901760
        %1855 = vmatprep.subr.mxu0 %v1854
        %v1856 = vand.u32 %v251, 4294901760
        %1857 = vmatpush1.msra.mxu0 %v1856
        %v1858 = vand.u32 %v254, 4294901760
        %1859 = vmatprep.subr.mxu0 %v1858
        %v1860 = vand.u32 %v253, 4294901760
        %1861 = vmatpush1.msra.mxu0 %v1860
        %v1862 = vand.u32 %v256, 4294901760
        %1863 = vmatprep.subr.mxu0 %v1862
        %v1864 = vand.u32 %v255, 4294901760
        %1865 = vmatpush1.msra.mxu0 %v1864
        %v1866 = vand.u32 %v258, 4294901760
        %1867 = vmatprep.subr.mxu0 %v1866
        %v1868 = vand.u32 %v257, 4294901760
        %1869 = vmatpush1.msra.mxu0 %v1868
        %v1870 = vand.u32 %v260, 4294901760
        %1871 = vmatprep.subr.mxu0 %v1870
        %v1872 = vand.u32 %v259, 4294901760
        %1873 = vmatpush1.msra.mxu0 %v1872
        %v1874 = vand.u32 %v262, 4294901760
        %1875 = vmatprep.subr.mxu0 %v1874
        %v1876 = vand.u32 %v261, 4294901760
        %1877 = vmatpush1.msra.mxu0 %v1876
        %v1878 = vand.u32 %v264, 4294901760
        %1879 = vmatprep.subr.mxu0 %v1878
        %v1880 = vand.u32 %v263, 4294901760
        %1881 = vmatpush1.msra.mxu0 %v1880
        %v1882 = vand.u32 %v266, 4294901760
        %1883 = vmatprep.subr.mxu0 %v1882
        %v1884 = vand.u32 %v265, 4294901760
        %1885 = vmatpush1.msra.mxu0 %v1884
        %v1886 = vand.u32 %v268, 4294901760
        %1887 = vmatprep.subr.mxu0 %v1886
        %v1888 = vand.u32 %v267, 4294901760
        %1889 = vmatpush1.msra.mxu0 %v1888
        %v1890 = vand.u32 %v270, 4294901760
        %1891 = vmatprep.subr.mxu0 %v1890
        %v1892 = vand.u32 %v269, 4294901760
        %1893 = vmatpush1.msra.mxu0 %v1892
        %v1894 = vand.u32 %v272, 4294901760
        %1895 = vmatprep.subr.mxu0 %v1894
        %v1896 = vand.u32 %v271, 4294901760
        %1897 = vmatpush1.msra.mxu0 %v1896
        %v1898 = vand.u32 %v274, 4294901760
        %1899 = vmatprep.subr.mxu0 %v1898
        %v1900 = vand.u32 %v273, 4294901760
        %1901 = vmatpush1.msra.mxu0 %v1900
        %v1902 = vand.u32 %v276, 4294901760
        %1903 = vmatprep.subr.mxu0 %v1902
        %v1904 = vand.u32 %v275, 4294901760
        %1905 = vmatpush1.msra.mxu0 %v1904
        %v1906 = vand.u32 %v278, 4294901760
        %1907 = vmatprep.subr.mxu0 %v1906
        %v1908 = vand.u32 %v277, 4294901760
        %1909 = vmatpush1.msra.mxu0 %v1908
        %v1910 = vand.u32 %v280, 4294901760
        %1911 = vmatprep.subr.mxu0 %v1910
        %v1912 = vand.u32 %v279, 4294901760
        %1913 = vmatpush1.msra.mxu0 %v1912
        %v1914 = vand.u32 %v282, 4294901760
        %1915 = vmatprep.subr.mxu0 %v1914
        %v1916 = vand.u32 %v281, 4294901760
        %1917 = vmatpush1.msra.mxu0 %v1916
        %v1918 = vand.u32 %v284, 4294901760
        %1919 = vmatprep.subr.mxu0 %v1918
        %v1920 = vand.u32 %v283, 4294901760
        %1921 = vmatpush1.msra.mxu0 %v1920
        %v1922 = vand.u32 %v286, 4294901760
        %1923 = vmatprep.subr.mxu0 %v1922
        %v1924 = vand.u32 %v285, 4294901760
        %1925 = vmatpush1.msra.mxu0 %v1924
        %v1926 = vand.u32 %v288, 4294901760
        %1927 = vmatprep.subr.mxu0 %v1926
        %v1928 = vand.u32 %v287, 4294901760
        %1929 = vmatpush1.msra.mxu0 %v1928
        %v1930 = vand.u32 %v290, 4294901760
        %1931 = vmatprep.subr.mxu0 %v1930
        %v1932 = vand.u32 %v289, 4294901760
        %1933 = vmatpush1.msra.mxu0 %v1932
        %v1934 = vand.u32 %v292, 4294901760
        %1935 = vmatprep.subr.mxu0 %v1934
        %v1936 = vand.u32 %v291, 4294901760
        %1937 = vmatpush1.msra.mxu0 %v1936
        %v1938 = vand.u32 %v294, 4294901760
        %1939 = vmatprep.subr.mxu0 %v1938
        %v1940 = vand.u32 %v293, 4294901760
        %1941 = vmatpush1.msra.mxu0 %v1940
        %v1942 = vand.u32 %v296, 4294901760
        %1943 = vmatprep.subr.mxu0 %v1942
        %v1944 = vand.u32 %v295, 4294901760
        %1945 = vmatpush1.msra.mxu0 %v1944
        %v1946 = vand.u32 %v298, 4294901760
        %1947 = vmatprep.subr.mxu0 %v1946
        %v1948 = vand.u32 %v297, 4294901760
        %1949 = vmatpush1.msra.mxu0 %v1948
        %v1950 = vand.u32 %v300, 4294901760
        %1951 = vmatprep.subr.mxu0 %v1950
        %v1952 = vand.u32 %v299, 4294901760
        %1953 = vmatpush1.msra.mxu0 %v1952
        %v1954 = vand.u32 %v222, 4294901760
        %1955 = vmatprep.mubr.f32.mxu0 %v1954
        %v1956 = vand.u32 %v221, 4294901760
        %1957 = vmatmul.mubr.f32.gmra.mrb[0].mxu0 %v1956
        %v1958 = vpop.f32.mrb[0].mxu0
        %v1959 = vadd.f32 %v1766, %v1958
        %v1960 = vpop.f32.mrb[0].mxu0
        %v1961 = vadd.f32 %v1768, %v1960
        %v1962 = vand.u32 %v224, 4294901760
        %1963 = vmatprep.mubr.f32.mxu0 %v1962
        %v1964 = vand.u32 %v223, 4294901760
        %1965 = vmatmul.mubr.f32.gmra.mrb[0].mxu0 %v1964
        %v1966 = vpop.f32.mrb[0].mxu0
        %v1967 = vadd.f32 %v1774, %v1966
        %v1968 = vpop.f32.mrb[0].mxu0
        %v1969 = vadd.f32 %v1776, %v1968
        %v1970 = vand.u32 %v226, 4294901760
        %1971 = vmatprep.mubr.f32.mxu0 %v1970
        %v1972 = vand.u32 %v225, 4294901760
        %1973 = vmatmul.mubr.f32.gmra.mrb[0].mxu0 %v1972
        %v1974 = vpop.f32.mrb[0].mxu0
        %v1975 = vadd.f32 %v1782, %v1974
        %v1976 = vpop.f32.mrb[0].mxu0
        %v1977 = vadd.f32 %v1784, %v1976
        %v1978 = vand.u32 %v228, 4294901760
        %1979 = vmatprep.mubr.f32.mxu0 %v1978
        %v1980 = vand.u32 %v227, 4294901760
        %1981 = vmatmul.mubr.f32.gmra.mrb[0].mxu0 %v1980
        %v1982 = vpop.f32.mrb[0].mxu0
        %v1983 = vadd.f32 %v1790, %v1982
        %v1984 = vpop.f32.mrb[0].mxu0
        %v1985 = vadd.f32 %v1792, %v1984
        %v1986 = vand.u32 %v230, 4294901760
        %1987 = vmatprep.mubr.f32.mxu0 %v1986
        %v1988 = vand.u32 %v229, 4294901760
        %1989 = vmatmul.mubr.f32.gmra.mrb[0].mxu0 %v1988
        %v1990 = vpop.f32.mrb[0].mxu0
        %v1991 = vadd.f32 %v1798, %v1990
        %v1992 = vpop.f32.mrb[0].mxu0
        %v1993 = vadd.f32 %v1800, %v1992
        %v1994 = vand.u32 %v232, 4294901760
        %1995 = vmatprep.mubr.f32.mxu0 %v1994
        %v1996 = vand.u32 %v231, 4294901760
        %1997 = vmatmul.mubr.f32.gmra.mrb[0].mxu0 %v1996
        %v1998 = vpop.f32.mrb[0].mxu0
        %v1999 = vadd.f32 %v1806, %v1998
        %v2000 = vpop.f32.mrb[0].mxu0
        %v2001 = vadd.f32 %v1808, %v2000
        %v2002 = vand.u32 %v234, 4294901760
        %2003 = vmatprep.mubr.f32.mxu0 %v2002
        %v2004 = vand.u32 %v233, 4294901760
        %2005 = vmatmul.mubr.f32.gmra.mrb[0].mxu0 %v2004
        %v2006 = vpop.f32.mrb[0].mxu0
        %v2007 = vadd.f32 %v1814, %v2006
        %v2008 = vpop.f32.mrb[0].mxu0
        %v2009 = vadd.f32 %v1816, %v2008
        %v2010 = vand.u32 %v236, 4294901760
        %2011 = vmatprep.mubr.f32.mxu0 %v2010
        %v2012 = vand.u32 %v235, 4294901760
        %2013 = vmatmul.mubr.f32.gmra.mrb[0].mxu0 %v2012
        %v2014 = vpop.f32.mrb[0].mxu0
        %v2015 = vadd.f32 %v1822, %v2014
        %v2016 = vpop.f32.mrb[0].mxu0
        %v2017 = vadd.f32 %v1824, %v2016
        %2018 = vdwg.mxu0
        %v2019 = vld [vmem:[#allocation7] sm:$0xff]
        %v2020 = vld [vmem:[#allocation7 + $0x8] sm:$0xff]
        %v2021 = vld [vmem:[#allocation7 + $0x10] sm:$0xff]
        %v2022 = vld [vmem:[#allocation7 + $0x18] sm:$0xff]
        %v2023 = vld [vmem:[#allocation7 + $0x20] sm:$0xff]
        %v2024 = vld [vmem:[#allocation7 + $0x28] sm:$0xff]
        %v2025 = vld [vmem:[#allocation7 + $0x30] sm:$0xff]
        %v2026 = vld [vmem:[#allocation7 + $0x38] sm:$0xff]
        %vm2027 = vcmask 523264
        %v2029 = vsel %vm2027, %v2019, 0
        %v2032 = vsel %vm2027, %v2020, 0
        %v2035 = vsel %vm2027, %v2021, 0
        %v2038 = vsel %vm2027, %v2022, 0
        %v2041 = vsel %vm2027, %v2023, 0
        %v2044 = vsel %vm2027, %v2024, 0
        %v2047 = vsel %vm2027, %v2025, 0
        %v2050 = vsel %vm2027, %v2026, 0
        %v2052 = vand.u32 %v1961, 4294901760
        %2053 = vmatprep.subr.mxu0 %v2052
        %v2054 = vand.u32 %v1959, 4294901760
        %2055 = vmatpush1.msra.mxu0 %v2054
        %v2056 = vand.u32 %v1969, 4294901760
        %2057 = vmatprep.subr.mxu0 %v2056
        %v2058 = vand.u32 %v1967, 4294901760
        %2059 = vmatpush1.msra.mxu0 %v2058
        %v2060 = vand.u32 %v1977, 4294901760
        %2061 = vmatprep.subr.mxu0 %v2060
        %v2062 = vand.u32 %v1975, 4294901760
        %2063 = vmatpush1.msra.mxu0 %v2062
        %v2064 = vand.u32 %v1985, 4294901760
        %2065 = vmatprep.subr.mxu0 %v2064
        %v2066 = vand.u32 %v1983, 4294901760
        %2067 = vmatpush1.msra.mxu0 %v2066
        %v2068 = vand.u32 %v1993, 4294901760
        %2069 = vmatprep.subr.mxu0 %v2068
        %v2070 = vand.u32 %v1991, 4294901760
        %2071 = vmatpush1.msra.mxu0 %v2070
        %v2072 = vand.u32 %v2001, 4294901760
        %2073 = vmatprep.subr.mxu0 %v2072
        %v2074 = vand.u32 %v1999, 4294901760
        %2075 = vmatpush1.msra.mxu0 %v2074
        %v2076 = vand.u32 %v2009, 4294901760
        %2077 = vmatprep.subr.mxu0 %v2076
        %v2078 = vand.u32 %v2007, 4294901760
        %2079 = vmatpush1.msra.mxu0 %v2078
        %v2080 = vand.u32 %v2017, 4294901760
        %2081 = vmatprep.subr.mxu0 %v2080
        %v2082 = vand.u32 %v2015, 4294901760
        %2083 = vmatpush1.msra.mxu0 %v2082
        %2084 = vmatprep.subr.mxu0 0.0
        %2085 = vmatpush1.msra.mxu0 0.0
        %2086 = vmatprep.subr.mxu0 0.0
        %2087 = vmatpush1.msra.mxu0 0.0
        %2088 = vmatprep.subr.mxu0 0.0
        %2089 = vmatpush1.msra.mxu0 0.0
        %2090 = vmatprep.subr.mxu0 0.0
        %2091 = vmatpush1.msra.mxu0 0.0
        %2092 = vmatprep.subr.mxu0 0.0
        %2093 = vmatpush1.msra.mxu0 0.0
        %2094 = vmatprep.subr.mxu0 0.0
        %2095 = vmatpush1.msra.mxu0 0.0
        %2096 = vmatprep.subr.mxu0 0.0
        %2097 = vmatpush1.msra.mxu0 0.0
        %2098 = vmatprep.subr.mxu0 0.0
        %2099 = vmatpush1.msra.mxu0 0.0
        %2100 = vmatprep.subr.mxu0 0.0
        %2101 = vmatpush1.msra.mxu0 0.0
        %2102 = vmatprep.subr.mxu0 0.0
        %2103 = vmatpush1.msra.mxu0 0.0
        %2104 = vmatprep.subr.mxu0 0.0
        %2105 = vmatpush1.msra.mxu0 0.0
        %2106 = vmatprep.subr.mxu0 0.0
        %2107 = vmatpush1.msra.mxu0 0.0
        %2108 = vmatprep.subr.mxu0 0.0
        %2109 = vmatpush1.msra.mxu0 0.0
        %2110 = vmatprep.subr.mxu0 0.0
        %2111 = vmatpush1.msra.mxu0 0.0
        %2112 = vmatprep.subr.mxu0 0.0
        %2113 = vmatpush1.msra.mxu0 0.0
        %2114 = vmatprep.subr.mxu0 0.0
        %2115 = vmatpush1.msra.mxu0 0.0
        %2116 = vmatprep.subr.mxu0 0.0
        %2117 = vmatpush1.msra.mxu0 0.0
        %2118 = vmatprep.subr.mxu0 0.0
        %2119 = vmatpush1.msra.mxu0 0.0
        %2120 = vmatprep.subr.mxu0 0.0
        %2121 = vmatpush1.msra.mxu0 0.0
        %2122 = vmatprep.subr.mxu0 0.0
        %2123 = vmatpush1.msra.mxu0 0.0
        %2124 = vmatprep.subr.mxu0 0.0
        %2125 = vmatpush1.msra.mxu0 0.0
        %2126 = vmatprep.subr.mxu0 0.0
        %2127 = vmatpush1.msra.mxu0 0.0
        %2128 = vmatprep.subr.mxu0 0.0
        %2129 = vmatpush1.msra.mxu0 0.0
        %2130 = vmatprep.subr.mxu0 0.0
        %2131 = vmatpush1.msra.mxu0 0.0
        %2132 = vmatprep.mubr.f32.mxu0 0.0
        %v2133 = vand.u32 %v2029, 4294901760
        %v2134 = vsub.f32 %v2029, %v2133
        %v2135 = vand.u32 %v2134, 4294901760
        %v2136 = vsub.f32 %v2134, %v2135
        %v2137 = vand.u32 %v2136, 4294901760
        %2138 = vmatmul.mubr.f32.gmra.mrb[0].mxu0 %v2137
        %v2139 = vpop.f32.mrb[0].mxu0
        %v2140 = vadd.f32 0.0, %v2139
        %v2141 = vpop.f32.mrb[0].mxu0
        %v2142 = vadd.f32 0.0, %v2141
        %2143 = vmatprep.mubr.f32.mxu0 0.0
        %v2144 = vand.u32 %v2032, 4294901760
        %v2145 = vsub.f32 %v2032, %v2144
        %v2146 = vand.u32 %v2145, 4294901760
        %v2147 = vsub.f32 %v2145, %v2146
        %v2148 = vand.u32 %v2147, 4294901760
        %2149 = vmatmul.mubr.f32.gmra.mrb[0].mxu0 %v2148
        %v2150 = vpop.f32.mrb[0].mxu0
        %v2151 = vadd.f32 0.0, %v2150
        %v2152 = vpop.f32.mrb[0].mxu0
        %v2153 = vadd.f32 0.0, %v2152
        %2154 = vmatprep.mubr.f32.mxu0 0.0
        %v2155 = vand.u32 %v2035, 4294901760
        %v2156 = vsub.f32 %v2035, %v2155
        %v2157 = vand.u32 %v2156, 4294901760
        %v2158 = vsub.f32 %v2156, %v2157
        %v2159 = vand.u32 %v2158, 4294901760
        %2160 = vmatmul.mubr.f32.gmra.mrb[0].mxu0 %v2159
        %v2161 = vpop.f32.mrb[0].mxu0
        %v2162 = vadd.f32 0.0, %v2161
        %v2163 = vpop.f32.mrb[0].mxu0
        %v2164 = vadd.f32 0.0, %v2163
        %2165 = vmatprep.mubr.f32.mxu0 0.0
        %v2166 = vand.u32 %v2038, 4294901760
        %v2167 = vsub.f32 %v2038, %v2166
        %v2168 = vand.u32 %v2167, 4294901760
        %v2169 = vsub.f32 %v2167, %v2168
        %v2170 = vand.u32 %v2169, 4294901760
        %2171 = vmatmul.mubr.f32.gmra.mrb[0].mxu0 %v2170
        %v2172 = vpop.f32.mrb[0].mxu0
        %v2173 = vadd.f32 0.0, %v2172
        %v2174 = vpop.f32.mrb[0].mxu0
        %v2175 = vadd.f32 0.0, %v2174
        %2176 = vmatprep.mubr.f32.mxu0 0.0
        %v2177 = vand.u32 %v2041, 4294901760
        %v2178 = vsub.f32 %v2041, %v2177
        %v2179 = vand.u32 %v2178, 4294901760
        %v2180 = vsub.f32 %v2178, %v2179
        %v2181 = vand.u32 %v2180, 4294901760
        %2182 = vmatmul.mubr.f32.gmra.mrb[0].mxu0 %v2181
        %v2183 = vpop.f32.mrb[0].mxu0
        %v2184 = vadd.f32 0.0, %v2183
        %v2185 = vpop.f32.mrb[0].mxu0
        %v2186 = vadd.f32 0.0, %v2185
        %2187 = vmatprep.mubr.f32.mxu0 0.0
        %v2188 = vand.u32 %v2044, 4294901760
        %v2189 = vsub.f32 %v2044, %v2188
        %v2190 = vand.u32 %v2189, 4294901760
        %v2191 = vsub.f32 %v2189, %v2190
        %v2192 = vand.u32 %v2191, 4294901760
        %2193 = vmatmul.mubr.f32.gmra.mrb[0].mxu0 %v2192
        %v2194 = vpop.f32.mrb[0].mxu0
        %v2195 = vadd.f32 0.0, %v2194
        %v2196 = vpop.f32.mrb[0].mxu0
        %v2197 = vadd.f32 0.0, %v2196
        %2198 = vmatprep.mubr.f32.mxu0 0.0
        %v2199 = vand.u32 %v2047, 4294901760
        %v2200 = vsub.f32 %v2047, %v2199
        %v2201 = vand.u32 %v2200, 4294901760
        %v2202 = vsub.f32 %v2200, %v2201
        %v2203 = vand.u32 %v2202, 4294901760
        %2204 = vmatmul.mubr.f32.gmra.mrb[0].mxu0 %v2203
        %v2205 = vpop.f32.mrb[0].mxu0
        %v2206 = vadd.f32 0.0, %v2205
        %v2207 = vpop.f32.mrb[0].mxu0
        %v2208 = vadd.f32 0.0, %v2207
        %2209 = vmatprep.mubr.f32.mxu0 0.0
        %v2210 = vand.u32 %v2050, 4294901760
        %v2211 = vsub.f32 %v2050, %v2210
        %v2212 = vand.u32 %v2211, 4294901760
        %v2213 = vsub.f32 %v2211, %v2212
        %v2214 = vand.u32 %v2213, 4294901760
        %2215 = vmatmul.mubr.f32.gmra.mrb[0].mxu0 %v2214
        %v2216 = vpop.f32.mrb[0].mxu0
        %v2217 = vadd.f32 0.0, %v2216
        %v2218 = vpop.f32.mrb[0].mxu0
        %v2219 = vadd.f32 0.0, %v2218
        %2220 = vdwg.mxu0
        %v2221 = vand.u32 %v1961, 4294901760
        %v2222 = vsub.f32 %v1961, %v2221
        %v2223 = vand.u32 %v2222, 4294901760
        %v2224 = vsub.f32 %v2222, %v2223
        %v2225 = vand.u32 %v2224, 4294901760
        %2226 = vmatprep.subr.mxu0 %v2225
        %v2227 = vand.u32 %v1959, 4294901760
        %v2228 = vsub.f32 %v1959, %v2227
        %v2229 = vand.u32 %v2228, 4294901760
        %v2230 = vsub.f32 %v2228, %v2229
        %v2231 = vand.u32 %v2230, 4294901760
        %2232 = vmatpush1.msra.mxu0 %v2231
        %v2233 = vand.u32 %v1969, 4294901760
        %v2234 = vsub.f32 %v1969, %v2233
        %v2235 = vand.u32 %v2234, 4294901760
        %v2236 = vsub.f32 %v2234, %v2235
        %v2237 = vand.u32 %v2236, 4294901760
        %2238 = vmatprep.subr.mxu0 %v2237
        %v2239 = vand.u32 %v1967, 4294901760
        %v2240 = vsub.f32 %v1967, %v2239
        %v2241 = vand.u32 %v2240, 4294901760
        %v2242 = vsub.f32 %v2240, %v2241
        %v2243 = vand.u32 %v2242, 4294901760
        %2244 = vmatpush1.msra.mxu0 %v2243
        %v2245 = vand.u32 %v1977, 4294901760
        %v2246 = vsub.f32 %v1977, %v2245
        %v2247 = vand.u32 %v2246, 4294901760
        %v2248 = vsub.f32 %v2246, %v2247
        %v2249 = vand.u32 %v2248, 4294901760
        %2250 = vmatprep.subr.mxu0 %v2249
        %v2251 = vand.u32 %v1975, 4294901760
        %v2252 = vsub.f32 %v1975, %v2251
        %v2253 = vand.u32 %v2252, 4294901760
        %v2254 = vsub.f32 %v2252, %v2253
        %v2255 = vand.u32 %v2254, 4294901760
        %2256 = vmatpush1.msra.mxu0 %v2255
        %v2257 = vand.u32 %v1985, 4294901760
        %v2258 = vsub.f32 %v1985, %v2257
        %v2259 = vand.u32 %v2258, 4294901760
        %v2260 = vsub.f32 %v2258, %v2259
        %v2261 = vand.u32 %v2260, 4294901760
        %2262 = vmatprep.subr.mxu0 %v2261
        %v2263 = vand.u32 %v1983, 4294901760
        %v2264 = vsub.f32 %v1983, %v2263
        %v2265 = vand.u32 %v2264, 4294901760
        %v2266 = vsub.f32 %v2264, %v2265
        %v2267 = vand.u32 %v2266, 4294901760
        %2268 = vmatpush1.msra.mxu0 %v2267
        %v2269 = vand.u32 %v1993, 4294901760
        %v2270 = vsub.f32 %v1993, %v2269
        %v2271 = vand.u32 %v2270, 4294901760
        %v2272 = vsub.f32 %v2270, %v2271
        %v2273 = vand.u32 %v2272, 4294901760
        %2274 = vmatprep.subr.mxu0 %v2273
        %v2275 = vand.u32 %v1991, 4294901760
        %v2276 = vsub.f32 %v1991, %v2275
        %v2277 = vand.u32 %v2276, 4294901760
        %v2278 = vsub.f32 %v2276, %v2277
        %v2279 = vand.u32 %v2278, 4294901760
        %2280 = vmatpush1.msra.mxu0 %v2279
        %v2281 = vand.u32 %v2001, 4294901760
        %v2282 = vsub.f32 %v2001, %v2281
        %v2283 = vand.u32 %v2282, 4294901760
        %v2284 = vsub.f32 %v2282, %v2283
        %v2285 = vand.u32 %v2284, 4294901760
        %2286 = vmatprep.subr.mxu0 %v2285
        %v2287 = vand.u32 %v1999, 4294901760
        %v2288 = vsub.f32 %v1999, %v2287
        %v2289 = vand.u32 %v2288, 4294901760
        %v2290 = vsub.f32 %v2288, %v2289
        %v2291 = vand.u32 %v2290, 4294901760
        %2292 = vmatpush1.msra.mxu0 %v2291
        %v2293 = vand.u32 %v2009, 4294901760
        %v2294 = vsub.f32 %v2009, %v2293
        %v2295 = vand.u32 %v2294, 4294901760
        %v2296 = vsub.f32 %v2294, %v2295
        %v2297 = vand.u32 %v2296, 4294901760
        %2298 = vmatprep.subr.mxu0 %v2297
        %v2299 = vand.u32 %v2007, 4294901760
        %v2300 = vsub.f32 %v2007, %v2299
        %v2301 = vand.u32 %v2300, 4294901760
        %v2302 = vsub.f32 %v2300, %v2301
        %v2303 = vand.u32 %v2302, 4294901760
        %2304 = vmatpush1.msra.mxu0 %v2303
        %v2305 = vand.u32 %v2017, 4294901760
        %v2306 = vsub.f32 %v2017, %v2305
        %v2307 = vand.u32 %v2306, 4294901760
        %v2308 = vsub.f32 %v2306, %v2307
        %v2309 = vand.u32 %v2308, 4294901760
        %2310 = vmatprep.subr.mxu0 %v2309
        %v2311 = vand.u32 %v2015, 4294901760
        %v2312 = vsub.f32 %v2015, %v2311
        %v2313 = vand.u32 %v2312, 4294901760
        %v2314 = vsub.f32 %v2312, %v2313
        %v2315 = vand.u32 %v2314, 4294901760
        %2316 = vmatpush1.msra.mxu0 %v2315
        %2317 = vmatprep.subr.mxu0 0.0
        %2318 = vmatpush1.msra.mxu0 0.0
        %2319 = vmatprep.subr.mxu0 0.0
        %2320 = vmatpush1.msra.mxu0 0.0
        %2321 = vmatprep.subr.mxu0 0.0
        %2322 = vmatpush1.msra.mxu0 0.0
        %2323 = vmatprep.subr.mxu0 0.0
        %2324 = vmatpush1.msra.mxu0 0.0
        %2325 = vmatprep.subr.mxu0 0.0
        %2326 = vmatpush1.msra.mxu0 0.0
        %2327 = vmatprep.subr.mxu0 0.0
        %2328 = vmatpush1.msra.mxu0 0.0
        %2329 = vmatprep.subr.mxu0 0.0
        %2330 = vmatpush1.msra.mxu0 0.0
        %2331 = vmatprep.subr.mxu0 0.0
        %2332 = vmatpush1.msra.mxu0 0.0
        %2333 = vmatprep.subr.mxu0 0.0
        %2334 = vmatpush1.msra.mxu0 0.0
        %2335 = vmatprep.subr.mxu0 0.0
        %2336 = vmatpush1.msra.mxu0 0.0
        %2337 = vmatprep.subr.mxu0 0.0
        %2338 = vmatpush1.msra.mxu0 0.0
        %2339 = vmatprep.subr.mxu0 0.0
        %2340 = vmatpush1.msra.mxu0 0.0
        %2341 = vmatprep.subr.mxu0 0.0
        %2342 = vmatpush1.msra.mxu0 0.0
        %2343 = vmatprep.subr.mxu0 0.0
        %2344 = vmatpush1.msra.mxu0 0.0
        %2345 = vmatprep.subr.mxu0 0.0
        %2346 = vmatpush1.msra.mxu0 0.0
        %2347 = vmatprep.subr.mxu0 0.0
        %2348 = vmatpush1.msra.mxu0 0.0
        %2349 = vmatprep.subr.mxu0 0.0
        %2350 = vmatpush1.msra.mxu0 0.0
        %2351 = vmatprep.subr.mxu0 0.0
        %2352 = vmatpush1.msra.mxu0 0.0
        %2353 = vmatprep.subr.mxu0 0.0
        %2354 = vmatpush1.msra.mxu0 0.0
        %2355 = vmatprep.subr.mxu0 0.0
        %2356 = vmatpush1.msra.mxu0 0.0
        %2357 = vmatprep.subr.mxu0 0.0
        %2358 = vmatpush1.msra.mxu0 0.0
        %2359 = vmatprep.subr.mxu0 0.0
        %2360 = vmatpush1.msra.mxu0 0.0
        %2361 = vmatprep.subr.mxu0 0.0
        %2362 = vmatpush1.msra.mxu0 0.0
        %2363 = vmatprep.subr.mxu0 0.0
        %2364 = vmatpush1.msra.mxu0 0.0
        %2365 = vmatprep.mubr.f32.mxu0 0.0
        %v2366 = vand.u32 %v2029, 4294901760
        %2367 = vmatmul.mubr.f32.gmra.mrb[0].mxu0 %v2366
        %v2368 = vpop.f32.mrb[0].mxu0
        %v2369 = vadd.f32 %v2140, %v2368
        %v2370 = vpop.f32.mrb[0].mxu0
        %v2371 = vadd.f32 %v2142, %v2370
        %2372 = vmatprep.mubr.f32.mxu0 0.0
        %v2373 = vand.u32 %v2032, 4294901760
        %2374 = vmatmul.mubr.f32.gmra.mrb[0].mxu0 %v2373
        %v2375 = vpop.f32.mrb[0].mxu0
        %v2376 = vadd.f32 %v2151, %v2375
        %v2377 = vpop.f32.mrb[0].mxu0
        %v2378 = vadd.f32 %v2153, %v2377
        %2379 = vmatprep.mubr.f32.mxu0 0.0
        %v2380 = vand.u32 %v2035, 4294901760
        %2381 = vmatmul.mubr.f32.gmra.mrb[0].mxu0 %v2380
        %v2382 = vpop.f32.mrb[0].mxu0
        %v2383 = vadd.f32 %v2162, %v2382
        %v2384 = vpop.f32.mrb[0].mxu0
        %v2385 = vadd.f32 %v2164, %v2384
        %2386 = vmatprep.mubr.f32.mxu0 0.0
        %v2387 = vand.u32 %v2038, 4294901760
        %2388 = vmatmul.mubr.f32.gmra.mrb[0].mxu0 %v2387
        %v2389 = vpop.f32.mrb[0].mxu0
        %v2390 = vadd.f32 %v2173, %v2389
        %v2391 = vpop.f32.mrb[0].mxu0
        %v2392 = vadd.f32 %v2175, %v2391
        %2393 = vmatprep.mubr.f32.mxu0 0.0
        %v2394 = vand.u32 %v2041, 4294901760
        %2395 = vmatmul.mubr.f32.gmra.mrb[0].mxu0 %v2394
        %v2396 = vpop.f32.mrb[0].mxu0
        %v2397 = vadd.f32 %v2184, %v2396
        %v2398 = vpop.f32.mrb[0].mxu0
        %v2399 = vadd.f32 %v2186, %v2398
        %2400 = vmatprep.mubr.f32.mxu0 0.0
        %v2401 = vand.u32 %v2044, 4294901760
        %2402 = vmatmul.mubr.f32.gmra.mrb[0].mxu0 %v2401
        %v2403 = vpop.f32.mrb[0].mxu0
        %v2404 = vadd.f32 %v2195, %v2403
        %v2405 = vpop.f32.mrb[0].mxu0
        %v2406 = vadd.f32 %v2197, %v2405
        %2407 = vmatprep.mubr.f32.mxu0 0.0
        %v2408 = vand.u32 %v2047, 4294901760
        %2409 = vmatmul.mubr.f32.gmra.mrb[0].mxu0 %v2408
        %v2410 = vpop.f32.mrb[0].mxu0
        %v2411 = vadd.f32 %v2206, %v2410
        %v2412 = vpop.f32.mrb[0].mxu0
        %v2413 = vadd.f32 %v2208, %v2412
        %2414 = vmatprep.mubr.f32.mxu0 0.0
        %v2415 = vand.u32 %v2050, 4294901760
        %2416 = vmatmul.mubr.f32.gmra.mrb[0].mxu0 %v2415
        %v2417 = vpop.f32.mrb[0].mxu0
        %v2418 = vadd.f32 %v2217, %v2417
        %v2419 = vpop.f32.mrb[0].mxu0
        %v2420 = vadd.f32 %v2219, %v2419
        %2421 = vdwg.mxu0
        %v2422 = vand.u32 %v1961, 4294901760
        %v2423 = vsub.f32 %v1961, %v2422
        %2424 = vmatprep.subr.mxu0 %v2423
        %v2425 = vand.u32 %v1959, 4294901760
        %v2426 = vsub.f32 %v1959, %v2425
        %2427 = vmatpush1.msra.mxu0 %v2426
        %v2428 = vand.u32 %v1969, 4294901760
        %v2429 = vsub.f32 %v1969, %v2428
        %2430 = vmatprep.subr.mxu0 %v2429
        %v2431 = vand.u32 %v1967, 4294901760
        %v2432 = vsub.f32 %v1967, %v2431
        %2433 = vmatpush1.msra.mxu0 %v2432
        %v2434 = vand.u32 %v1977, 4294901760
        %v2435 = vsub.f32 %v1977, %v2434
        %2436 = vmatprep.subr.mxu0 %v2435
        %v2437 = vand.u32 %v1975, 4294901760
        %v2438 = vsub.f32 %v1975, %v2437
        %2439 = vmatpush1.msra.mxu0 %v2438
        %v2440 = vand.u32 %v1985, 4294901760
        %v2441 = vsub.f32 %v1985, %v2440
        %2442 = vmatprep.subr.mxu0 %v2441
        %v2443 = vand.u32 %v1983, 4294901760
        %v2444 = vsub.f32 %v1983, %v2443
        %2445 = vmatpush1.msra.mxu0 %v2444
        %v2446 = vand.u32 %v1993, 4294901760
        %v2447 = vsub.f32 %v1993, %v2446
        %2448 = vmatprep.subr.mxu0 %v2447
        %v2449 = vand.u32 %v1991, 4294901760
        %v2450 = vsub.f32 %v1991, %v2449
        %2451 = vmatpush1.msra.mxu0 %v2450
        %v2452 = vand.u32 %v2001, 4294901760
        %v2453 = vsub.f32 %v2001, %v2452
        %2454 = vmatprep.subr.mxu0 %v2453
        %v2455 = vand.u32 %v1999, 4294901760
        %v2456 = vsub.f32 %v1999, %v2455
        %2457 = vmatpush1.msra.mxu0 %v2456
        %v2458 = vand.u32 %v2009, 4294901760
        %v2459 = vsub.f32 %v2009, %v2458
        %2460 = vmatprep.subr.mxu0 %v2459
        %v2461 = vand.u32 %v2007, 4294901760
        %v2462 = vsub.f32 %v2007, %v2461
        %2463 = vmatpush1.msra.mxu0 %v2462
        %v2464 = vand.u32 %v2017, 4294901760
        %v2465 = vsub.f32 %v2017, %v2464
        %2466 = vmatprep.subr.mxu0 %v2465
        %v2467 = vand.u32 %v2015, 4294901760
        %v2468 = vsub.f32 %v2015, %v2467
        %2469 = vmatpush1.msra.mxu0 %v2468
        %2470 = vmatprep.subr.mxu0 0.0
        %2471 = vmatpush1.msra.mxu0 0.0
        %2472 = vmatprep.subr.mxu0 0.0
        %2473 = vmatpush1.msra.mxu0 0.0
        %2474 = vmatprep.subr.mxu0 0.0
        %2475 = vmatpush1.msra.mxu0 0.0
        %2476 = vmatprep.subr.mxu0 0.0
        %2477 = vmatpush1.msra.mxu0 0.0
        %2478 = vmatprep.subr.mxu0 0.0
        %2479 = vmatpush1.msra.mxu0 0.0
        %2480 = vmatprep.subr.mxu0 0.0
        %2481 = vmatpush1.msra.mxu0 0.0
        %2482 = vmatprep.subr.mxu0 0.0
        %2483 = vmatpush1.msra.mxu0 0.0
        %2484 = vmatprep.subr.mxu0 0.0
        %2485 = vmatpush1.msra.mxu0 0.0
        %2486 = vmatprep.subr.mxu0 0.0
        %2487 = vmatpush1.msra.mxu0 0.0
        %2488 = vmatprep.subr.mxu0 0.0
        %2489 = vmatpush1.msra.mxu0 0.0
        %2490 = vmatprep.subr.mxu0 0.0
        %2491 = vmatpush1.msra.mxu0 0.0
        %2492 = vmatprep.subr.mxu0 0.0
        %2493 = vmatpush1.msra.mxu0 0.0
        %2494 = vmatprep.subr.mxu0 0.0
        %2495 = vmatpush1.msra.mxu0 0.0
        %2496 = vmatprep.subr.mxu0 0.0
        %2497 = vmatpush1.msra.mxu0 0.0
        %2498 = vmatprep.subr.mxu0 0.0
        %2499 = vmatpush1.msra.mxu0 0.0
        %2500 = vmatprep.subr.mxu0 0.0
        %2501 = vmatpush1.msra.mxu0 0.0
        %2502 = vmatprep.subr.mxu0 0.0
        %2503 = vmatpush1.msra.mxu0 0.0
        %2504 = vmatprep.subr.mxu0 0.0
        %2505 = vmatpush1.msra.mxu0 0.0
        %2506 = vmatprep.subr.mxu0 0.0
        %2507 = vmatpush1.msra.mxu0 0.0
        %2508 = vmatprep.subr.mxu0 0.0
        %2509 = vmatpush1.msra.mxu0 0.0
        %2510 = vmatprep.subr.mxu0 0.0
        %2511 = vmatpush1.msra.mxu0 0.0
        %2512 = vmatprep.subr.mxu0 0.0
        %2513 = vmatpush1.msra.mxu0 0.0
        %2514 = vmatprep.subr.mxu0 0.0
        %2515 = vmatpush1.msra.mxu0 0.0
        %2516 = vmatprep.subr.mxu0 0.0
        %2517 = vmatpush1.msra.mxu0 0.0
        %2518 = vmatprep.mubr.f32.mxu0 0.0
        %v2519 = vand.u32 %v2029, 4294901760
        %v2520 = vsub.f32 %v2029, %v2519
        %2521 = vmatmul.mubr.f32.gmra.mrb[0].mxu0 %v2520
        %v2522 = vpop.f32.mrb[0].mxu0
        %v2523 = vadd.f32 %v2369, %v2522
        %v2524 = vpop.f32.mrb[0].mxu0
        %v2525 = vadd.f32 %v2371, %v2524
        %2526 = vmatprep.mubr.f32.mxu0 0.0
        %v2527 = vand.u32 %v2032, 4294901760
        %v2528 = vsub.f32 %v2032, %v2527
        %2529 = vmatmul.mubr.f32.gmra.mrb[0].mxu0 %v2528
        %v2530 = vpop.f32.mrb[0].mxu0
        %v2531 = vadd.f32 %v2376, %v2530
        %v2532 = vpop.f32.mrb[0].mxu0
        %v2533 = vadd.f32 %v2378, %v2532
        %2534 = vmatprep.mubr.f32.mxu0 0.0
        %v2535 = vand.u32 %v2035, 4294901760
        %v2536 = vsub.f32 %v2035, %v2535
        %2537 = vmatmul.mubr.f32.gmra.mrb[0].mxu0 %v2536
        %v2538 = vpop.f32.mrb[0].mxu0
        %v2539 = vadd.f32 %v2383, %v2538
        %v2540 = vpop.f32.mrb[0].mxu0
        %v2541 = vadd.f32 %v2385, %v2540
        %2542 = vmatprep.mubr.f32.mxu0 0.0
        %v2543 = vand.u32 %v2038, 4294901760
        %v2544 = vsub.f32 %v2038, %v2543
        %2545 = vmatmul.mubr.f32.gmra.mrb[0].mxu0 %v2544
        %v2546 = vpop.f32.mrb[0].mxu0
        %v2547 = vadd.f32 %v2390, %v2546
        %v2548 = vpop.f32.mrb[0].mxu0
        %v2549 = vadd.f32 %v2392, %v2548
        %2550 = vmatprep.mubr.f32.mxu0 0.0
        %v2551 = vand.u32 %v2041, 4294901760
        %v2552 = vsub.f32 %v2041, %v2551
        %2553 = vmatmul.mubr.f32.gmra.mrb[0].mxu0 %v2552
        %v2554 = vpop.f32.mrb[0].mxu0
        %v2555 = vadd.f32 %v2397, %v2554
        %v2556 = vpop.f32.mrb[0].mxu0
        %v2557 = vadd.f32 %v2399, %v2556
        %2558 = vmatprep.mubr.f32.mxu0 0.0
        %v2559 = vand.u32 %v2044, 4294901760
        %v2560 = vsub.f32 %v2044, %v2559
        %2561 = vmatmul.mubr.f32.gmra.mrb[0].mxu0 %v2560
        %v2562 = vpop.f32.mrb[0].mxu0
        %v2563 = vadd.f32 %v2404, %v2562
        %v2564 = vpop.f32.mrb[0].mxu0
        %v2565 = vadd.f32 %v2406, %v2564
        %2566 = vmatprep.mubr.f32.mxu0 0.0
        %v2567 = vand.u32 %v2047, 4294901760
        %v2568 = vsub.f32 %v2047, %v2567
        %2569 = vmatmul.mubr.f32.gmra.mrb[0].mxu0 %v2568
        %v2570 = vpop.f32.mrb[0].mxu0
        %v2571 = vadd.f32 %v2411, %v2570
        %v2572 = vpop.f32.mrb[0].mxu0
        %v2573 = vadd.f32 %v2413, %v2572
        %2574 = vmatprep.mubr.f32.mxu0 0.0
        %v2575 = vand.u32 %v2050, 4294901760
        %v2576 = vsub.f32 %v2050, %v2575
        %2577 = vmatmul.mubr.f32.gmra.mrb[0].mxu0 %v2576
        %v2578 = vpop.f32.mrb[0].mxu0
        %v2579 = vadd.f32 %v2418, %v2578
        %v2580 = vpop.f32.mrb[0].mxu0
        %v2581 = vadd.f32 %v2420, %v2580
        %2582 = vdwg.mxu0
        %v2583 = vand.u32 %v1961, 4294901760
        %2584 = vmatprep.subr.mxu0 %v2583
        %v2585 = vand.u32 %v1959, 4294901760
        %2586 = vmatpush1.msra.mxu0 %v2585
        %v2587 = vand.u32 %v1969, 4294901760
        %2588 = vmatprep.subr.mxu0 %v2587
        %v2589 = vand.u32 %v1967, 4294901760
        %2590 = vmatpush1.msra.mxu0 %v2589
        %v2591 = vand.u32 %v1977, 4294901760
        %2592 = vmatprep.subr.mxu0 %v2591
        %v2593 = vand.u32 %v1975, 4294901760
        %2594 = vmatpush1.msra.mxu0 %v2593
        %v2595 = vand.u32 %v1985, 4294901760
        %2596 = vmatprep.subr.mxu0 %v2595
        %v2597 = vand.u32 %v1983, 4294901760
        %2598 = vmatpush1.msra.mxu0 %v2597
        %v2599 = vand.u32 %v1993, 4294901760
        %2600 = vmatprep.subr.mxu0 %v2599
        %v2601 = vand.u32 %v1991, 4294901760
        %2602 = vmatpush1.msra.mxu0 %v2601
        %v2603 = vand.u32 %v2001, 4294901760
        %2604 = vmatprep.subr.mxu0 %v2603
        %v2605 = vand.u32 %v1999, 4294901760
        %2606 = vmatpush1.msra.mxu0 %v2605
        %v2607 = vand.u32 %v2009, 4294901760
        %2608 = vmatprep.subr.mxu0 %v2607
        %v2609 = vand.u32 %v2007, 4294901760
        %2610 = vmatpush1.msra.mxu0 %v2609
        %v2611 = vand.u32 %v2017, 4294901760
        %2612 = vmatprep.subr.mxu0 %v2611
        %v2613 = vand.u32 %v2015, 4294901760
        %2614 = vmatpush1.msra.mxu0 %v2613
        %2615 = vmatprep.subr.mxu0 0.0
        %2616 = vmatpush1.msra.mxu0 0.0
        %2617 = vmatprep.subr.mxu0 0.0
        %2618 = vmatpush1.msra.mxu0 0.0
        %2619 = vmatprep.subr.mxu0 0.0
        %2620 = vmatpush1.msra.mxu0 0.0
        %2621 = vmatprep.subr.mxu0 0.0
        %2622 = vmatpush1.msra.mxu0 0.0
        %2623 = vmatprep.subr.mxu0 0.0
        %2624 = vmatpush1.msra.mxu0 0.0
        %2625 = vmatprep.subr.mxu0 0.0
        %2626 = vmatpush1.msra.mxu0 0.0
        %2627 = vmatprep.subr.mxu0 0.0
        %2628 = vmatpush1.msra.mxu0 0.0
        %2629 = vmatprep.subr.mxu0 0.0
        %2630 = vmatpush1.msra.mxu0 0.0
        %2631 = vmatprep.subr.mxu0 0.0
        %2632 = vmatpush1.msra.mxu0 0.0
        %2633 = vmatprep.subr.mxu0 0.0
        %2634 = vmatpush1.msra.mxu0 0.0
        %2635 = vmatprep.subr.mxu0 0.0
        %2636 = vmatpush1.msra.mxu0 0.0
        %2637 = vmatprep.subr.mxu0 0.0
        %2638 = vmatpush1.msra.mxu0 0.0
        %2639 = vmatprep.subr.mxu0 0.0
        %2640 = vmatpush1.msra.mxu0 0.0
        %2641 = vmatprep.subr.mxu0 0.0
        %2642 = vmatpush1.msra.mxu0 0.0
        %2643 = vmatprep.subr.mxu0 0.0
        %2644 = vmatpush1.msra.mxu0 0.0
        %2645 = vmatprep.subr.mxu0 0.0
        %2646 = vmatpush1.msra.mxu0 0.0
        %2647 = vmatprep.subr.mxu0 0.0
        %2648 = vmatpush1.msra.mxu0 0.0
        %2649 = vmatprep.subr.mxu0 0.0
        %2650 = vmatpush1.msra.mxu0 0.0
        %2651 = vmatprep.subr.mxu0 0.0
        %2652 = vmatpush1.msra.mxu0 0.0
        %2653 = vmatprep.subr.mxu0 0.0
        %2654 = vmatpush1.msra.mxu0 0.0
        %2655 = vmatprep.subr.mxu0 0.0
        %2656 = vmatpush1.msra.mxu0 0.0
        %2657 = vmatprep.subr.mxu0 0.0
        %2658 = vmatpush1.msra.mxu0 0.0
        %2659 = vmatprep.subr.mxu0 0.0
        %2660 = vmatpush1.msra.mxu0 0.0
        %2661 = vmatprep.subr.mxu0 0.0
        %2662 = vmatpush1.msra.mxu0 0.0
        %2663 = vmatprep.mubr.f32.mxu0 0.0
        %v2664 = vand.u32 %v2029, 4294901760
        %v2665 = vsub.f32 %v2029, %v2664
        %v2666 = vand.u32 %v2665, 4294901760
        %2667 = vmatmul.mubr.f32.gmra.mrb[0].mxu0 %v2666
        %v2668 = vpop.f32.mrb[0].mxu0
        %v2669 = vadd.f32 %v2523, %v2668
        %v2670 = vpop.f32.mrb[0].mxu0
        %v2671 = vadd.f32 %v2525, %v2670
        %2672 = vmatprep.mubr.f32.mxu0 0.0
        %v2673 = vand.u32 %v2032, 4294901760
        %v2674 = vsub.f32 %v2032, %v2673
        %v2675 = vand.u32 %v2674, 4294901760
        %2676 = vmatmul.mubr.f32.gmra.mrb[0].mxu0 %v2675
        %v2677 = vpop.f32.mrb[0].mxu0
        %v2678 = vadd.f32 %v2531, %v2677
        %v2679 = vpop.f32.mrb[0].mxu0
        %v2680 = vadd.f32 %v2533, %v2679
        %2681 = vmatprep.mubr.f32.mxu0 0.0
        %v2682 = vand.u32 %v2035, 4294901760
        %v2683 = vsub.f32 %v2035, %v2682
        %v2684 = vand.u32 %v2683, 4294901760
        %2685 = vmatmul.mubr.f32.gmra.mrb[0].mxu0 %v2684
        %v2686 = vpop.f32.mrb[0].mxu0
        %v2687 = vadd.f32 %v2539, %v2686
        %v2688 = vpop.f32.mrb[0].mxu0
        %v2689 = vadd.f32 %v2541, %v2688
        %2690 = vmatprep.mubr.f32.mxu0 0.0
        %v2691 = vand.u32 %v2038, 4294901760
        %v2692 = vsub.f32 %v2038, %v2691
        %v2693 = vand.u32 %v2692, 4294901760
        %2694 = vmatmul.mubr.f32.gmra.mrb[0].mxu0 %v2693
        %v2695 = vpop.f32.mrb[0].mxu0
        %v2696 = vadd.f32 %v2547, %v2695
        %v2697 = vpop.f32.mrb[0].mxu0
        %v2698 = vadd.f32 %v2549, %v2697
        %2699 = vmatprep.mubr.f32.mxu0 0.0
        %v2700 = vand.u32 %v2041, 4294901760
        %v2701 = vsub.f32 %v2041, %v2700
        %v2702 = vand.u32 %v2701, 4294901760
        %2703 = vmatmul.mubr.f32.gmra.mrb[0].mxu0 %v2702
        %v2704 = vpop.f32.mrb[0].mxu0
        %v2705 = vadd.f32 %v2555, %v2704
        %v2706 = vpop.f32.mrb[0].mxu0
        %v2707 = vadd.f32 %v2557, %v2706
        %2708 = vmatprep.mubr.f32.mxu0 0.0
        %v2709 = vand.u32 %v2044, 4294901760
        %v2710 = vsub.f32 %v2044, %v2709
        %v2711 = vand.u32 %v2710, 4294901760
        %2712 = vmatmul.mubr.f32.gmra.mrb[0].mxu0 %v2711
        %v2713 = vpop.f32.mrb[0].mxu0
        %v2714 = vadd.f32 %v2563, %v2713
        %v2715 = vpop.f32.mrb[0].mxu0
        %v2716 = vadd.f32 %v2565, %v2715
        %2717 = vmatprep.mubr.f32.mxu0 0.0
        %v2718 = vand.u32 %v2047, 4294901760
        %v2719 = vsub.f32 %v2047, %v2718
        %v2720 = vand.u32 %v2719, 4294901760
        %2721 = vmatmul.mubr.f32.gmra.mrb[0].mxu0 %v2720
        %v2722 = vpop.f32.mrb[0].mxu0
        %v2723 = vadd.f32 %v2571, %v2722
        %v2724 = vpop.f32.mrb[0].mxu0
        %v2725 = vadd.f32 %v2573, %v2724
        %2726 = vmatprep.mubr.f32.mxu0 0.0
        %v2727 = vand.u32 %v2050, 4294901760
        %v2728 = vsub.f32 %v2050, %v2727
        %v2729 = vand.u32 %v2728, 4294901760
        %2730 = vmatmul.mubr.f32.gmra.mrb[0].mxu0 %v2729
        %v2731 = vpop.f32.mrb[0].mxu0
        %v2732 = vadd.f32 %v2579, %v2731
        %v2733 = vpop.f32.mrb[0].mxu0
        %v2734 = vadd.f32 %v2581, %v2733
        %2735 = vdwg.mxu0
        %v2736 = vand.u32 %v1961, 4294901760
        %v2737 = vsub.f32 %v1961, %v2736
        %v2738 = vand.u32 %v2737, 4294901760
        %2739 = vmatprep.subr.mxu0 %v2738
        %v2740 = vand.u32 %v1959, 4294901760
        %v2741 = vsub.f32 %v1959, %v2740
        %v2742 = vand.u32 %v2741, 4294901760
        %2743 = vmatpush1.msra.mxu0 %v2742
        %v2744 = vand.u32 %v1969, 4294901760
        %v2745 = vsub.f32 %v1969, %v2744
        %v2746 = vand.u32 %v2745, 4294901760
        %2747 = vmatprep.subr.mxu0 %v2746
        %v2748 = vand.u32 %v1967, 4294901760
        %v2749 = vsub.f32 %v1967, %v2748
        %v2750 = vand.u32 %v2749, 4294901760
        %2751 = vmatpush1.msra.mxu0 %v2750
        %v2752 = vand.u32 %v1977, 4294901760
        %v2753 = vsub.f32 %v1977, %v2752
        %v2754 = vand.u32 %v2753, 4294901760
        %2755 = vmatprep.subr.mxu0 %v2754
        %v2756 = vand.u32 %v1975, 4294901760
        %v2757 = vsub.f32 %v1975, %v2756
        %v2758 = vand.u32 %v2757, 4294901760
        %2759 = vmatpush1.msra.mxu0 %v2758
        %v2760 = vand.u32 %v1985, 4294901760
        %v2761 = vsub.f32 %v1985, %v2760
        %v2762 = vand.u32 %v2761, 4294901760
        %2763 = vmatprep.subr.mxu0 %v2762
        %v2764 = vand.u32 %v1983, 4294901760
        %v2765 = vsub.f32 %v1983, %v2764
        %v2766 = vand.u32 %v2765, 4294901760
        %2767 = vmatpush1.msra.mxu0 %v2766
        %v2768 = vand.u32 %v1993, 4294901760
        %v2769 = vsub.f32 %v1993, %v2768
        %v2770 = vand.u32 %v2769, 4294901760
        %2771 = vmatprep.subr.mxu0 %v2770
        %v2772 = vand.u32 %v1991, 4294901760
        %v2773 = vsub.f32 %v1991, %v2772
        %v2774 = vand.u32 %v2773, 4294901760
        %2775 = vmatpush1.msra.mxu0 %v2774
        %v2776 = vand.u32 %v2001, 4294901760
        %v2777 = vsub.f32 %v2001, %v2776
        %v2778 = vand.u32 %v2777, 4294901760
        %2779 = vmatprep.subr.mxu0 %v2778
        %v2780 = vand.u32 %v1999, 4294901760
        %v2781 = vsub.f32 %v1999, %v2780
        %v2782 = vand.u32 %v2781, 4294901760
        %2783 = vmatpush1.msra.mxu0 %v2782
        %v2784 = vand.u32 %v2009, 4294901760
        %v2785 = vsub.f32 %v2009, %v2784
        %v2786 = vand.u32 %v2785, 4294901760
        %2787 = vmatprep.subr.mxu0 %v2786
        %v2788 = vand.u32 %v2007, 4294901760
        %v2789 = vsub.f32 %v2007, %v2788
        %v2790 = vand.u32 %v2789, 4294901760
        %2791 = vmatpush1.msra.mxu0 %v2790
        %v2792 = vand.u32 %v2017, 4294901760
        %v2793 = vsub.f32 %v2017, %v2792
        %v2794 = vand.u32 %v2793, 4294901760
        %2795 = vmatprep.subr.mxu0 %v2794
        %v2796 = vand.u32 %v2015, 4294901760
        %v2797 = vsub.f32 %v2015, %v2796
        %v2798 = vand.u32 %v2797, 4294901760
        %2799 = vmatpush1.msra.mxu0 %v2798
        %2800 = vmatprep.subr.mxu0 0.0
        %2801 = vmatpush1.msra.mxu0 0.0
        %2802 = vmatprep.subr.mxu0 0.0
        %2803 = vmatpush1.msra.mxu0 0.0
        %2804 = vmatprep.subr.mxu0 0.0
        %2805 = vmatpush1.msra.mxu0 0.0
        %2806 = vmatprep.subr.mxu0 0.0
        %2807 = vmatpush1.msra.mxu0 0.0
        %2808 = vmatprep.subr.mxu0 0.0
        %2809 = vmatpush1.msra.mxu0 0.0
        %2810 = vmatprep.subr.mxu0 0.0
        %2811 = vmatpush1.msra.mxu0 0.0
        %2812 = vmatprep.subr.mxu0 0.0
        %2813 = vmatpush1.msra.mxu0 0.0
        %2814 = vmatprep.subr.mxu0 0.0
        %2815 = vmatpush1.msra.mxu0 0.0
        %2816 = vmatprep.subr.mxu0 0.0
        %2817 = vmatpush1.msra.mxu0 0.0
        %2818 = vmatprep.subr.mxu0 0.0
        %2819 = vmatpush1.msra.mxu0 0.0
        %2820 = vmatprep.subr.mxu0 0.0
        %2821 = vmatpush1.msra.mxu0 0.0
        %2822 = vmatprep.subr.mxu0 0.0
        %2823 = vmatpush1.msra.mxu0 0.0
        %2824 = vmatprep.subr.mxu0 0.0
        %2825 = vmatpush1.msra.mxu0 0.0
        %2826 = vmatprep.subr.mxu0 0.0
        %2827 = vmatpush1.msra.mxu0 0.0
        %2828 = vmatprep.subr.mxu0 0.0
        %2829 = vmatpush1.msra.mxu0 0.0
        %2830 = vmatprep.subr.mxu0 0.0
        %2831 = vmatpush1.msra.mxu0 0.0
        %2832 = vmatprep.subr.mxu0 0.0
        %2833 = vmatpush1.msra.mxu0 0.0
        %2834 = vmatprep.subr.mxu0 0.0
        %2835 = vmatpush1.msra.mxu0 0.0
        %2836 = vmatprep.subr.mxu0 0.0
        %2837 = vmatpush1.msra.mxu0 0.0
        %2838 = vmatprep.subr.mxu0 0.0
        %2839 = vmatpush1.msra.mxu0 0.0
        %2840 = vmatprep.subr.mxu0 0.0
        %2841 = vmatpush1.msra.mxu0 0.0
        %2842 = vmatprep.subr.mxu0 0.0
        %2843 = vmatpush1.msra.mxu0 0.0
        %2844 = vmatprep.subr.mxu0 0.0
        %2845 = vmatpush1.msra.mxu0 0.0
        %2846 = vmatprep.subr.mxu0 0.0
        %2847 = vmatpush1.msra.mxu0 0.0
        %2848 = vmatprep.mubr.f32.mxu0 0.0
        %v2849 = vand.u32 %v2029, 4294901760
        %2850 = vmatmul.mubr.f32.gmra.mrb[0].mxu0 %v2849
        %v2851 = vpop.f32.mrb[0].mxu0
        %v2852 = vadd.f32 %v2669, %v2851
        %v2853 = vpop.f32.mrb[0].mxu0
        %v2854 = vadd.f32 %v2671, %v2853
        %2855 = vmatprep.mubr.f32.mxu0 0.0
        %v2856 = vand.u32 %v2032, 4294901760
        %2857 = vmatmul.mubr.f32.gmra.mrb[0].mxu0 %v2856
        %v2858 = vpop.f32.mrb[0].mxu0
        %v2859 = vadd.f32 %v2678, %v2858
        %v2860 = vpop.f32.mrb[0].mxu0
        %v2861 = vadd.f32 %v2680, %v2860
        %2862 = vmatprep.mubr.f32.mxu0 0.0
        %v2863 = vand.u32 %v2035, 4294901760
        %2864 = vmatmul.mubr.f32.gmra.mrb[0].mxu0 %v2863
        %v2865 = vpop.f32.mrb[0].mxu0
        %v2866 = vadd.f32 %v2687, %v2865
        %v2867 = vpop.f32.mrb[0].mxu0
        %v2868 = vadd.f32 %v2689, %v2867
        %2869 = vmatprep.mubr.f32.mxu0 0.0
        %v2870 = vand.u32 %v2038, 4294901760
        %2871 = vmatmul.mubr.f32.gmra.mrb[0].mxu0 %v2870
        %v2872 = vpop.f32.mrb[0].mxu0
        %v2873 = vadd.f32 %v2696, %v2872
        %v2874 = vpop.f32.mrb[0].mxu0
        %v2875 = vadd.f32 %v2698, %v2874
        %2876 = vmatprep.mubr.f32.mxu0 0.0
        %v2877 = vand.u32 %v2041, 4294901760
        %2878 = vmatmul.mubr.f32.gmra.mrb[0].mxu0 %v2877
        %v2879 = vpop.f32.mrb[0].mxu0
        %v2880 = vadd.f32 %v2705, %v2879
        %v2881 = vpop.f32.mrb[0].mxu0
        %v2882 = vadd.f32 %v2707, %v2881
        %2883 = vmatprep.mubr.f32.mxu0 0.0
        %v2884 = vand.u32 %v2044, 4294901760
        %2885 = vmatmul.mubr.f32.gmra.mrb[0].mxu0 %v2884
        %v2886 = vpop.f32.mrb[0].mxu0
        %v2887 = vadd.f32 %v2714, %v2886
        %v2888 = vpop.f32.mrb[0].mxu0
        %v2889 = vadd.f32 %v2716, %v2888
        %2890 = vmatprep.mubr.f32.mxu0 0.0
        %v2891 = vand.u32 %v2047, 4294901760
        %2892 = vmatmul.mubr.f32.gmra.mrb[0].mxu0 %v2891
        %v2893 = vpop.f32.mrb[0].mxu0
        %v2894 = vadd.f32 %v2723, %v2893
        %v2895 = vpop.f32.mrb[0].mxu0
        %v2896 = vadd.f32 %v2725, %v2895
        %2897 = vmatprep.mubr.f32.mxu0 0.0
        %v2898 = vand.u32 %v2050, 4294901760
        %2899 = vmatmul.mubr.f32.gmra.mrb[0].mxu0 %v2898
        %v2900 = vpop.f32.mrb[0].mxu0
        %v2901 = vadd.f32 %v2732, %v2900
        %v2902 = vpop.f32.mrb[0].mxu0
        %v2903 = vadd.f32 %v2734, %v2902
        %2904 = vdwg.mxu0
        %v2905 = vand.u32 %v1961, 4294901760
        %2906 = vmatprep.subr.mxu0 %v2905
        %v2907 = vand.u32 %v1959, 4294901760
        %2908 = vmatpush1.msra.mxu0 %v2907
        %v2909 = vand.u32 %v1969, 4294901760
        %2910 = vmatprep.subr.mxu0 %v2909
        %v2911 = vand.u32 %v1967, 4294901760
        %2912 = vmatpush1.msra.mxu0 %v2911
        %v2913 = vand.u32 %v1977, 4294901760
        %2914 = vmatprep.subr.mxu0 %v2913
        %v2915 = vand.u32 %v1975, 4294901760
        %2916 = vmatpush1.msra.mxu0 %v2915
        %v2917 = vand.u32 %v1985, 4294901760
        %2918 = vmatprep.subr.mxu0 %v2917
        %v2919 = vand.u32 %v1983, 4294901760
        %2920 = vmatpush1.msra.mxu0 %v2919
        %v2921 = vand.u32 %v1993, 4294901760
        %2922 = vmatprep.subr.mxu0 %v2921
        %v2923 = vand.u32 %v1991, 4294901760
        %2924 = vmatpush1.msra.mxu0 %v2923
        %v2925 = vand.u32 %v2001, 4294901760
        %2926 = vmatprep.subr.mxu0 %v2925
        %v2927 = vand.u32 %v1999, 4294901760
        %2928 = vmatpush1.msra.mxu0 %v2927
        %v2929 = vand.u32 %v2009, 4294901760
        %2930 = vmatprep.subr.mxu0 %v2929
        %v2931 = vand.u32 %v2007, 4294901760
        %2932 = vmatpush1.msra.mxu0 %v2931
        %v2933 = vand.u32 %v2017, 4294901760
        %2934 = vmatprep.subr.mxu0 %v2933
        %v2935 = vand.u32 %v2015, 4294901760
        %2936 = vmatpush1.msra.mxu0 %v2935
        %2937 = vmatprep.subr.mxu0 0.0
        %2938 = vmatpush1.msra.mxu0 0.0
        %2939 = vmatprep.subr.mxu0 0.0
        %2940 = vmatpush1.msra.mxu0 0.0
        %2941 = vmatprep.subr.mxu0 0.0
        %2942 = vmatpush1.msra.mxu0 0.0
        %2943 = vmatprep.subr.mxu0 0.0
        %2944 = vmatpush1.msra.mxu0 0.0
        %2945 = vmatprep.subr.mxu0 0.0
        %2946 = vmatpush1.msra.mxu0 0.0
        %2947 = vmatprep.subr.mxu0 0.0
        %2948 = vmatpush1.msra.mxu0 0.0
        %2949 = vmatprep.subr.mxu0 0.0
        %2950 = vmatpush1.msra.mxu0 0.0
        %2951 = vmatprep.subr.mxu0 0.0
        %2952 = vmatpush1.msra.mxu0 0.0
        %2953 = vmatprep.subr.mxu0 0.0
        %2954 = vmatpush1.msra.mxu0 0.0
        %2955 = vmatprep.subr.mxu0 0.0
        %2956 = vmatpush1.msra.mxu0 0.0
        %2957 = vmatprep.subr.mxu0 0.0
        %2958 = vmatpush1.msra.mxu0 0.0
        %2959 = vmatprep.subr.mxu0 0.0
        %2960 = vmatpush1.msra.mxu0 0.0
        %2961 = vmatprep.subr.mxu0 0.0
        %2962 = vmatpush1.msra.mxu0 0.0
        %2963 = vmatprep.subr.mxu0 0.0
        %2964 = vmatpush1.msra.mxu0 0.0
        %2965 = vmatprep.subr.mxu0 0.0
        %2966 = vmatpush1.msra.mxu0 0.0
        %2967 = vmatprep.subr.mxu0 0.0
        %2968 = vmatpush1.msra.mxu0 0.0
        %2969 = vmatprep.subr.mxu0 0.0
        %2970 = vmatpush1.msra.mxu0 0.0
        %2971 = vmatprep.subr.mxu0 0.0
        %2972 = vmatpush1.msra.mxu0 0.0
        %2973 = vmatprep.subr.mxu0 0.0
        %2974 = vmatpush1.msra.mxu0 0.0
        %2975 = vmatprep.subr.mxu0 0.0
        %2976 = vmatpush1.msra.mxu0 0.0
        %2977 = vmatprep.subr.mxu0 0.0
        %2978 = vmatpush1.msra.mxu0 0.0
        %2979 = vmatprep.subr.mxu0 0.0
        %2980 = vmatpush1.msra.mxu0 0.0
        %2981 = vmatprep.subr.mxu0 0.0
        %2982 = vmatpush1.msra.mxu0 0.0
        %2983 = vmatprep.subr.mxu0 0.0
        %2984 = vmatpush1.msra.mxu0 0.0
        %2985 = vmatprep.mubr.f32.mxu0 0.0
        %v2986 = vand.u32 %v2029, 4294901760
        %2987 = vmatmul.mubr.f32.gmra.mrb[0].mxu0 %v2986
        %v2988 = vpop.f32.mrb[0].mxu0
        %v2989 = vadd.f32 %v2852, %v2988
        %v2990 = vpop.f32.mrb[0].mxu0
        %v2991 = vadd.f32 %v2854, %v2990
        %2992 = vmatprep.mubr.f32.mxu0 0.0
        %v2993 = vand.u32 %v2032, 4294901760
        %2994 = vmatmul.mubr.f32.gmra.mrb[0].mxu0 %v2993
        %v2995 = vpop.f32.mrb[0].mxu0
        %v2996 = vadd.f32 %v2859, %v2995
        %v2997 = vpop.f32.mrb[0].mxu0
        %v2998 = vadd.f32 %v2861, %v2997
        %2999 = vmatprep.mubr.f32.mxu0 0.0
        %v3000 = vand.u32 %v2035, 4294901760
        %3001 = vmatmul.mubr.f32.gmra.mrb[0].mxu0 %v3000
        %v3002 = vpop.f32.mrb[0].mxu0
        %v3003 = vadd.f32 %v2866, %v3002
        %v3004 = vpop.f32.mrb[0].mxu0
        %v3005 = vadd.f32 %v2868, %v3004
        %3006 = vmatprep.mubr.f32.mxu0 0.0
        %v3007 = vand.u32 %v2038, 4294901760
        %3008 = vmatmul.mubr.f32.gmra.mrb[0].mxu0 %v3007
        %v3009 = vpop.f32.mrb[0].mxu0
        %v3010 = vadd.f32 %v2873, %v3009
        %v3011 = vpop.f32.mrb[0].mxu0
        %v3012 = vadd.f32 %v2875, %v3011
        %3013 = vmatprep.mubr.f32.mxu0 0.0
        %v3014 = vand.u32 %v2041, 4294901760
        %3015 = vmatmul.mubr.f32.gmra.mrb[0].mxu0 %v3014
        %v3016 = vpop.f32.mrb[0].mxu0
        %v3017 = vadd.f32 %v2880, %v3016
        %v3018 = vpop.f32.mrb[0].mxu0
        %v3019 = vadd.f32 %v2882, %v3018
        %3020 = vmatprep.mubr.f32.mxu0 0.0
        %v3021 = vand.u32 %v2044, 4294901760
        %3022 = vmatmul.mubr.f32.gmra.mrb[0].mxu0 %v3021
        %v3023 = vpop.f32.mrb[0].mxu0
        %v3024 = vadd.f32 %v2887, %v3023
        %v3025 = vpop.f32.mrb[0].mxu0
        %v3026 = vadd.f32 %v2889, %v3025
        %3027 = vmatprep.mubr.f32.mxu0 0.0
        %v3028 = vand.u32 %v2047, 4294901760
        %3029 = vmatmul.mubr.f32.gmra.mrb[0].mxu0 %v3028
        %v3030 = vpop.f32.mrb[0].mxu0
        %v3031 = vadd.f32 %v2894, %v3030
        %v3032 = vpop.f32.mrb[0].mxu0
        %v3033 = vadd.f32 %v2896, %v3032
        %3034 = vmatprep.mubr.f32.mxu0 0.0
        %v3035 = vand.u32 %v2050, 4294901760
        %3036 = vmatmul.mubr.f32.gmra.mrb[0].mxu0 %v3035
        %v3037 = vpop.f32.mrb[0].mxu0
        %v3038 = vadd.f32 %v2901, %v3037
        %v3039 = vpop.f32.mrb[0].mxu0
        %v3040 = vadd.f32 %v2903, %v3039
        %3041 = vdwg.mxu0
        %3042 = vst [vmem:[%s218] sm:$0xff] %v2989
        %3043 = vst [vmem:[%s218 + $0x8] sm:$0xff] %v2991
        %3044 = vst [vmem:[%s218 + $0x10] sm:$0xff] %v2996
        %3045 = vst [vmem:[%s218 + $0x18] sm:$0xff] %v2998
        %3046 = vst [vmem:[%s218 + $0x20] sm:$0xff] %v3003
        %3047 = vst [vmem:[%s218 + $0x28] sm:$0xff] %v3005
        %3048 = vst [vmem:[%s218 + $0x30] sm:$0xff] %v3010
        %3049 = vst [vmem:[%s218 + $0x38] sm:$0xff] %v3012
        %3050 = vst [vmem:[%s218 + $0x40] sm:$0xff] %v3017
        %3051 = vst [vmem:[%s218 + $0x48] sm:$0xff] %v3019
        %3052 = vst [vmem:[%s218 + $0x50] sm:$0xff] %v3024
        %3053 = vst [vmem:[%s218 + $0x58] sm:$0xff] %v3026
        %3054 = vst [vmem:[%s218 + $0x60] sm:$0xff] %v3031
        %3055 = vst [vmem:[%s218 + $0x68] sm:$0xff] %v3033
        %3056 = vst [vmem:[%s218 + $0x70] sm:$0xff] %v3038
        %3057 = vst [vmem:[%s218 + $0x78] sm:$0xff] %v3040
        %s3058 = sand.u32 %s97, 1
        %s3059 = scalar_lea.sflag [#allocation4], %s3058
        %s3060 = sand.u32 %s97, 1
        %s3061 = smul.addr %s3060, 128
        %s3062 = scalar_lea.vmem [#allocation8], %s3061
        // Predicated region
        $region45: #{tpu_custom_call.1} parent=31 // pred_check
          %p3063 = pneg %p107
        $region46: #{tpu_custom_call.1} parent=31 // pred_check_branch
          %3065 = sbr.rel (%p3063) target = $region48
        $region47: #{tpu_custom_call.1} parent=31 // pred_region
          %s3066 = smul.u32 4, %s21
          %s3068 = ssub.s32 2048, 2048
          %3069 = vsyncadd %s3059, %s3068
          %s3070 = smul.addr %s3066, 4
          %s3071 = smul.addr %s3070, 128
          %s3072 = scalar_lea.hbm %s3, %s3071
          %s3073 = sshll.u32 %s3062, 4
          %s3074 = int_to_ptr.vmem [resolvable:$true] %s3073
          %3079 = dma.vmem_to_hbm [thread:$0]  %s3074, 2048, %s3072, %s3059, 256, 256, 16
        $region48: #{tpu_custom_call.1} parent=31 // pred_fallthru
          _
      $region32: #{tpu_custom_call.1} parent=5 // pred_fallthru
        _
      %p3080 = scmp.le.s32.totalorder 2, %s16
      // Predicated region
      $region49: #{tpu_custom_call.1} parent=5 // pred_check
        %p3081 = pneg %p3080
      $region50: #{tpu_custom_call.1} parent=5 // pred_check_branch
        %3083 = sbr.rel (%p3081) target = $region52
      $region51: #{tpu_custom_call.1} parent=5 // pred_region
        %s3084 = ssub.s32 %s16, 2
        // Predicated region
        $region53: #{tpu_custom_call.1} parent=51 // pred_check
          %p3085 = pneg %p113
        $region54: #{tpu_custom_call.1} parent=51 // pred_check_branch
          %3087 = sbr.rel (%p3085) target = $region56
        $region55: #{tpu_custom_call.1} parent=51 // pred_region
          %s3088 = sand.u32 %s98, 1
          %s3089 = scalar_lea.sflag [#allocation4], %s3088
          %s3090 = sand.u32 %s98, 1
          %s3091 = smul.addr %s3090, 128
          %s3092 = scalar_lea.vmem [#allocation8], %s3091
          %3093 = dma.done %s3089, 2048
        $region56: #{tpu_custom_call.1} parent=51 // pred_fallthru
          _
      $region52: #{tpu_custom_call.1} parent=5 // pred_fallthru
        _
    $region6: #{tpu_custom_call.1} parent=1 // loop_footer
      %s20 = sadd.s32 1, %s16
    $region7: #{tpu_custom_call.1} parent=1 // loop_footer_branch
      %15 = sbr.rel target = $region3
    $region8: #{tpu_custom_call.1} parent=1 // loop_exit
      _
    %3094 = vsyncpa [#allocation3], 1
    %s3095 = scalar_lea.sflag [#allocation3], 1
    %3096 = vsyncpa %s3095, 1
    %3097 = vsyncpa [#allocation6], 1
    %3098 = vsyncpa [#allocation4], 1
    %s3099 = scalar_lea.sflag [#allocation4], 1
    %3100 = vsyncpa %s3099, 1

</llo_original>
